<compile_context>
chip_gen: v7x
topology: tpu7x:2x2x1
jax: 0.10.0
libtpu: 0.0.40
codegen_flags: <defaults>
</compile_context>

<pallas_src>
import functools
import math

import jax
import jax.numpy as jnp
from jax.experimental import pallas as pl
from jax.experimental.pallas import tpu as pltpu


def _round_up(x, m):
    return ((x + m - 1) // m) * m


def _choose_tb(B, NC, D, K):
    """Pick TB = output batch rows per grid step (TM = TB*NC matmul rows)."""
    x_row_bytes = D * 4                    # x rows stream in as f32
    w_bytes = 2 * D * K * 2                # resident bf16 weight, 2 buffers
    # VMEM guard: double-buffered f32 x tile + weight must fit the smallest
    # scoped-VMEM default (16 MiB on v5e); keep ~4 MiB headroom for the rest.
    x_budget = max((12 << 20) - w_bytes, 2 * 8 * NC * x_row_bytes)
    vmem_cap_tm = max(NC, x_budget // (2 * x_row_bytes))
    target_tm = max(NC, min(vmem_cap_tm, (4 << 20) // x_row_bytes))
    # Cap TB so the crop-sum mask matmul (TB*TM*K MACs) stays a small fraction
    # of the main matmul (TM*D*K MACs) and the (TB, TM) mask stays tiny.
    tb_cap = min(target_tm // NC, 256, max(8, D // 2))
    tb_cap = max(8, (tb_cap // 8) * 8)

    # Preferred: >= 2 grid steps (v7x dual-TC) with tb a multiple-of-8 divisor
    # of B -> zero padding, zero dead rows, no extra HBM copy of x.
    if B >= 16:
        hi = min(tb_cap, max(8, ((B // 2) // 8) * 8))
        for tb in range(hi, 7, -8):
            if B % tb == 0:
                return tb
    # Small / awkward batch: one full-width step (blocks == full array dims).
    if B <= tb_cap:
        return B
    # Rare fallback: padded batch.  Pick the multiple-of-8 tile minimizing a
    # simple step-time model (~0.35us/step overhead vs ~1 TB/s tile DMA).
    best_tb, best_t = 8, None
    for tb in range(8, tb_cap + 1, 8):
        steps = -(-B // tb)
        t = steps * max(0.35e-6, tb * NC * x_row_bytes / 1e12)
        if best_t is None or t < best_t:
            best_tb, best_t = tb, t
    return best_tb


def multicrop_linear_kernel(mask_ref, x_ref, w_ref, b_ref, o_ref, *, inv_nc):
    # mask_ref: (TB, TM) bf16 0/1 block-sum matrix (resident across the grid)
    # x_ref:    (TM, D)  f32  TM = TB*NC flattened crop rows (streamed)
    # w_ref:    (D, K)   bf16 inner Linear weight (resident)
    # b_ref:    (1, K)   f32  inner Linear bias (resident)
    # o_ref:    (TB, K)  f32  per-batch crop-mean predictions
    x_bf = x_ref[...].astype(jnp.bfloat16)               # in-kernel cast (VPU)
    preds = jnp.dot(x_bf, w_ref[...],
                    preferred_element_type=jnp.float32)  # (TM, K) MXU
    sums = jnp.dot(mask_ref[...], preds.astype(jnp.bfloat16),
                   preferred_element_type=jnp.float32)   # (TB, K) crop sum
    o_ref[...] = sums * inv_nc + b_ref[...]              # exact 1/NC in f32


@functools.partial(jax.jit, static_argnames=("tb",))
def multicrop_forward(x, w, b, *, tb=None):
    """x: (B, NC, *sample_shape), w: (D, K), b: (1, K) -> (B, K) float32."""
    B, NC = x.shape[:2]
    D = math.prod(x.shape[2:])
    K = w.shape[1]

    if tb is None:
        tb = _choose_tb(B, NC, D, K)
    tm = tb * NC
    b_pad = _round_up(B, tb)

    # Keep x in its native dtype (f32): the bf16 cast is done in-kernel so x
    # makes exactly one HBM pass; the reshape is a layout-preserving no-copy.
    x2d = x.reshape(B * NC, D)
    if b_pad != B:
        # Rare fallback only (no suitable divisor of B): one extra HBM copy.
        x2d = jnp.pad(x2d, ((0, (b_pad - B) * NC), (0, 0)))
    w_bf = w.astype(jnp.bfloat16)
    b_f32 = b.reshape(1, K).astype(jnp.float32)
    # 0/1 block-sum mask (exact in bf16); 1/NC is applied in f32 in-kernel.
    mask = jnp.repeat(jnp.eye(tb, dtype=jnp.bfloat16), NC, axis=1)  # (tb, tm)

    n_rows = b_pad * NC
    cost = pl.CostEstimate(
        flops=2 * n_rows * D * K + 2 * b_pad * tm * K + 2 * b_pad * K,
        transcendentals=0,
        bytes_accessed=(x2d.size * x2d.dtype.itemsize + w_bf.size * 2
                        + mask.size * 2 + b_f32.size * 4 + b_pad * K * 4),
    )

    kernel = functools.partial(multicrop_linear_kernel, inv_nc=1.0 / NC)
    out = pl.pallas_call(
        kernel,
        out_shape=jax.ShapeDtypeStruct((b_pad, K), jnp.float32),
        grid_spec=pltpu.PrefetchScalarGridSpec(
            num_scalar_prefetch=0,
            grid=(b_pad // tb,),
            in_specs=[
                pl.BlockSpec((tb, tm), lambda i: (0, 0)),   # mask (resident)
                pl.BlockSpec((tm, D), lambda i: (i, 0)),    # x    (streamed)
                pl.BlockSpec((D, K), lambda i: (0, 0)),     # w    (resident)
                pl.BlockSpec((1, K), lambda i: (0, 0)),     # bias (resident)
            ],
            out_specs=pl.BlockSpec((tb, K), lambda i: (i, 0)),
        ),
        compiler_params=pltpu.CompilerParams(
            dimension_semantics=("parallel",)),
        cost_estimate=cost,
    )(mask, x2d, w_bf, b_f32)
    return out[:B]


if __name__ == "__main__":
    # (batch, num_crops, C, H, W); D = C*H*W = 1024, K = 128 (lane-dense).
    # B=96, NC=4 -> tb=48 (divisor of B): 2 grid steps, no batch padding.
    B, NC, C, H, W = 96, 4, 4, 16, 16
    D = C * H * W
    K = 128

    key = jax.random.PRNGKey(0)
    kx, kw, kb = jax.random.split(key, 3)
    x = jax.random.normal(kx, (B, NC, C, H, W), dtype=jnp.float32)
    # Deterministic synthetic parameters for the inner Linear(D, K) model.
    w = jax.random.normal(kw, (D, K), dtype=jnp.float32) * 0.02
    bias = jax.random.normal(kb, (1, K), dtype=jnp.float32) * 0.1

    out = jax.block_until_ready(multicrop_forward(x, w, bias))

    # Pure-JAX f32 reference of predict_multicrop(model, x, reduce='mean').
    flat = x.reshape(B * NC, D)
    ref = (flat @ w + bias).reshape(B, NC, K).mean(axis=1)

    assert out.shape == (B, K), out.shape
    # bf16 matmul operands (f32 accumulation) -> loosened tolerance vs f32 ref.
    assert jnp.allclose(out, ref, atol=5e-2, rtol=5e-2), \
        float(jnp.max(jnp.abs(out - ref)))
    print("KERNEL_OK")
</pallas_src>

<mosaic_0001>
module attributes {stable_mosaic.version = 11 : i64} {
  func.func @multicrop_linear_kernel(%arg0: i32, %arg1: memref<48x192xbf16, #tpu.memory_space<vmem>>, %arg2: memref<192x1024xf32, #tpu.memory_space<vmem>>, %arg3: memref<1024x128xbf16, #tpu.memory_space<vmem>>, %arg4: memref<1x128xf32, #tpu.memory_space<vmem>>, %arg5: memref<48x128xf32, #tpu.memory_space<vmem>>) attributes {dimension_semantics = [#tpu.dimension_semantics<parallel>], iteration_bounds = array<i64: 2>, scalar_prefetch = 0 : i64, scratch_operands = 0 : i64, tpu.core_type = #tpu.core_type<tc>, window_params = [{pipeline_mode = #tpu.pipeline_mode<synchronous>, transform_indices = @transform_0, window_bounds = array<i64: 48, 192>}, {transform_indices = @transform_1, window_bounds = array<i64: 192, 1024>}, {pipeline_mode = #tpu.pipeline_mode<synchronous>, transform_indices = @transform_2, window_bounds = array<i64: 1024, 128>}, {pipeline_mode = #tpu.pipeline_mode<synchronous>, transform_indices = @transform_3, window_bounds = array<i64: 1, 128>}, {transform_indices = @transform_4, window_bounds = array<i64: 48, 128>}]} {
    %c0 = arith.constant 0 : index
    %c0_0 = arith.constant 0 : index
    %0 = vector.load %arg2[%c0, %c0_0] : memref<192x1024xf32, #tpu.memory_space<vmem>>, vector<192x1024xf32>
    %1 = arith.truncf %0 : vector<192x1024xf32> to vector<192x1024xbf16>
    %c0_1 = arith.constant 0 : index
    %c0_2 = arith.constant 0 : index
    %2 = vector.load %arg3[%c0_1, %c0_2] : memref<1024x128xbf16, #tpu.memory_space<vmem>>, vector<1024x128xbf16>
    %cst = arith.constant dense<0.000000e+00> : vector<192x128xf32>
    %3 = tpu.matmul %1, %2, %cst {dimension_numbers = #tpu.dot_dimension_numbers<[1], [0], [0], [1], [0, 0, 1, 1], [], []>} : vector<192x1024xbf16>, vector<1024x128xbf16>, vector<192x128xf32> -> vector<192x128xf32>
    %c0_3 = arith.constant 0 : index
    %c0_4 = arith.constant 0 : index
    %4 = vector.load %arg1[%c0_3, %c0_4] : memref<48x192xbf16, #tpu.memory_space<vmem>>, vector<48x192xbf16>
    %5 = arith.truncf %3 : vector<192x128xf32> to vector<192x128xbf16>
    %cst_5 = arith.constant dense<0.000000e+00> : vector<48x128xf32>
    %6 = tpu.matmul %4, %5, %cst_5 {dimension_numbers = #tpu.dot_dimension_numbers<[1], [0], [0], [1], [0, 0, 1, 1], [], []>} : vector<48x192xbf16>, vector<192x128xbf16>, vector<48x128xf32> -> vector<48x128xf32>
    %cst_6 = arith.constant 2.500000e-01 : f32
    %7 = vector.broadcast %cst_6 : f32 to vector<48x128xf32>
    %8 = arith.mulf %6, %7 : vector<48x128xf32>
    %c0_7 = arith.constant 0 : index
    %c0_8 = arith.constant 0 : index
    %9 = vector.load %arg4[%c0_7, %c0_8] : memref<1x128xf32, #tpu.memory_space<vmem>>, vector<1x128xf32>
    %10 = vector.broadcast %9 : vector<1x128xf32> to vector<48x128xf32>
    %11 = arith.addf %8, %10 : vector<48x128xf32>
    %c0_9 = arith.constant 0 : index
    %c0_10 = arith.constant 0 : index
    %12 = vector.load %arg5[%c0_9, %c0_10] : memref<48x128xf32, #tpu.memory_space<vmem>>, vector<48x128xf32>
    tpu.vector_store %arg5[%c0_9, %c0_10], %11 {strides = array<i32>} : memref<48x128xf32, #tpu.memory_space<vmem>>, vector<48x128xf32>,
    return
  }
  func.func @transform_0(%arg0: i32) -> (i32, i32) {
    %c0_i32 = arith.constant 0 : i32
    %c0_i32_0 = arith.constant 0 : i32
    %c0_i32_1 = arith.constant 0 : i32
    return %c0_i32, %c0_i32_0 : i32, i32
  }
  func.func @transform_1(%arg0: i32) -> (i32, i32) {
    %c0_i32 = arith.constant 0 : i32
    %c0_i32_0 = arith.constant 0 : i32
    return %arg0, %c0_i32 : i32, i32
  }
  func.func @transform_2(%arg0: i32) -> (i32, i32) {
    %c0_i32 = arith.constant 0 : i32
    %c0_i32_0 = arith.constant 0 : i32
    %c0_i32_1 = arith.constant 0 : i32
    return %c0_i32, %c0_i32_0 : i32, i32
  }
  func.func @transform_3(%arg0: i32) -> (i32, i32) {
    %c0_i32 = arith.constant 0 : i32
    %c0_i32_0 = arith.constant 0 : i32
    %c0_i32_1 = arith.constant 0 : i32
    return %c0_i32, %c0_i32_0 : i32, i32
  }
  func.func @transform_4(%arg0: i32) -> (i32, i32) {
    %c0_i32 = arith.constant 0 : i32
    %c0_i32_0 = arith.constant 0 : i32
    return %arg0, %c0_i32 : i32, i32
  }
}

</mosaic_0001>

<llo_original>
// kernel: multicrop_forward.1
$region0: #{multicrop_forward.1}
  #allocation0 [shape = 'u32[]', space=smem, size = 0x4, offset = 0x4, fixed_abs, tag = 'smem constant byte address 0x4 - core index']
  #allocation1 [shape = 'u32[144,128]{1,0:T(1,128)}', space=vmem, size = 0x12000, scoped, tag = 'internal scratch']
  %s0 = inlined_call_operand.vmem [shape: bf16[48,192], index: 0, kind: input, shape index: {}]
  %s1 = inlined_call_operand.vmem [shape: f32[384,1024], index: 1, kind: input, shape index: {}]
  %s2 = inlined_call_operand.vmem [shape: bf16[1024,128], index: 2, kind: input, shape index: {}]
  %s3 = inlined_call_operand.vmem [shape: f32[1,128], index: 3, kind: input, shape index: {}]
  %s4 = inlined_call_operand.hbm [shape: f32[96,128], index: 4, kind: output, shape index: {}]
  %s5 = sld [smem:[#allocation0]]
  $region49: #{multicrop_forward.1} parent=0
    _
  %s7 = ssub.s32 1, %s5
  %s8 = scalar_select 0, %s7, %s5
  $region1: #{multicrop_forward.1} parent=0
    #allocation2 [shape = 'u8[49152]{0}', space=vmem, size = 0xc000, scoped, tag = 'output window, operand 0']
    #allocation3 [shape = 's32[2]{0}', space=sflag, size = 0x8, scoped, tag = 'scoped memory for multicrop_forward.1']
    %9 = vsyncpa [#allocation3], 0
    %s10 = scalar_lea.sflag [#allocation3], 1
    %11 = vsyncpa %s10, 0
    loop: start=0, step=1, limit=4
    $region2: #{multicrop_forward.1} parent=1 // loop_pre_header
      _
    $region3: #{multicrop_forward.1} parent=1 // loop_header
      %s13 = sphi 0, %s17
      %p14 = scmp.ge.s32.totalorder %s13, 4
      %s21 = sphi 0, %s21
      %s23 = sphi 0, %s21
      %s24 = sphi 0, %s23
      %s38 = sphi 0, %s24
      %s44 = sphi 0, %s46
      %s47 = sphi 0, %s44
      %s48 = sphi 0, %s47
      %s64 = sphi 0, %s48
      %s68 = sphi 0, %s68
      %s70 = sphi 0, %s68
      %s71 = sphi 0, %s70
      %s85 = sphi 0, %s71
      %s89 = sphi 0, %s89
      %s91 = sphi 0, %s89
      %s92 = sphi 0, %s91
      %s106 = sphi 0, %s92
      %s112 = sphi 0, %s114
      %s115 = sphi 0, %s112
      %s116 = sphi 0, %s115
      %s132 = sphi 0, %s116
    $region4: #{multicrop_forward.1} parent=1 // loop_header_branch
      %16 = sbr.rel (%p14) target = $region8
    $region5: #{multicrop_forward.1} parent=1 // loop_body
      %s18 = ssub.s32 %s13, 1
      %s19 = ssub.s32 %s13, 2
      %s20 = sadd.s32 %s13, 1
      %s22 = sadd.s32 %s21, 1
      %p25 = scmp.eq.s32.totalorder %s13, 1
      %p26 = scmp.ne.s32.totalorder %s21, %s23
      %p27 = scmp.eq.s32.totalorder %s13, 0
      %p28 = por %p26, %p27
      %p29 = scmp.ne.s32.totalorder %s21, %s23
      %p30 = scmp.eq.s32.totalorder %s18, 1
      %p31 = por %p29, %p30
      %p32 = scmp.ne.s32.totalorder %s23, %s24
      %p33 = scmp.eq.s32.totalorder %s18, 0
      %p34 = por %p32, %p33
      %p35 = scmp.ne.s32.totalorder %s23, %s24
      %p36 = scmp.eq.s32.totalorder %s19, 1
      %p37 = por %p35, %p36
      %p39 = scmp.ne.s32.totalorder %s24, %s38
      %p40 = scmp.eq.s32.totalorder %s19, 0
      %p41 = por %p39, %p40
      %s42 = ssub.s32 %s13, %s20
      %p43 = scmp.eq.s32.totalorder %s42, 0
      %s45 = sadd.s32 %s44, 1
      %s46 = scalar_select %p43, %s44, %s45
      %p49 = pneg %p43
      %p50 = scmp.eq.s32.totalorder %s13, 1
      %p51 = por %p49, %p50
      %p52 = scmp.ne.s32.totalorder %s44, %s47
      %p53 = scmp.eq.s32.totalorder %s13, 0
      %p54 = por %p52, %p53
      %p55 = scmp.ne.s32.totalorder %s44, %s47
      %p56 = scmp.eq.s32.totalorder %s18, 1
      %p57 = por %p55, %p56
      %p58 = scmp.ne.s32.totalorder %s47, %s48
      %p59 = scmp.eq.s32.totalorder %s18, 0
      %p60 = por %p58, %p59
      %p61 = scmp.ne.s32.totalorder %s47, %s48
      %p62 = scmp.eq.s32.totalorder %s19, 1
      %p63 = por %p61, %p62
      %p65 = scmp.ne.s32.totalorder %s48, %s64
      %p66 = scmp.eq.s32.totalorder %s19, 0
      %p67 = por %p65, %p66
      %s69 = sadd.s32 %s68, 1
      %p72 = scmp.eq.s32.totalorder %s13, 1
      %p73 = scmp.ne.s32.totalorder %s68, %s70
      %p74 = scmp.eq.s32.totalorder %s13, 0
      %p75 = por %p73, %p74
      %p76 = scmp.ne.s32.totalorder %s68, %s70
      %p77 = scmp.eq.s32.totalorder %s18, 1
      %p78 = por %p76, %p77
      %p79 = scmp.ne.s32.totalorder %s70, %s71
      %p80 = scmp.eq.s32.totalorder %s18, 0
      %p81 = por %p79, %p80
      %p82 = scmp.ne.s32.totalorder %s70, %s71
      %p83 = scmp.eq.s32.totalorder %s19, 1
      %p84 = por %p82, %p83
      %p86 = scmp.ne.s32.totalorder %s71, %s85
      %p87 = scmp.eq.s32.totalorder %s19, 0
      %p88 = por %p86, %p87
      %s90 = sadd.s32 %s89, 1
      %p93 = scmp.eq.s32.totalorder %s13, 1
      %p94 = scmp.ne.s32.totalorder %s89, %s91
      %p95 = scmp.eq.s32.totalorder %s13, 0
      %p96 = por %p94, %p95
      %p97 = scmp.ne.s32.totalorder %s89, %s91
      %p98 = scmp.eq.s32.totalorder %s18, 1
      %p99 = por %p97, %p98
      %p100 = scmp.ne.s32.totalorder %s91, %s92
      %p101 = scmp.eq.s32.totalorder %s18, 0
      %p102 = por %p100, %p101
      %p103 = scmp.ne.s32.totalorder %s91, %s92
      %p104 = scmp.eq.s32.totalorder %s19, 1
      %p105 = por %p103, %p104
      %p107 = scmp.ne.s32.totalorder %s92, %s106
      %p108 = scmp.eq.s32.totalorder %s19, 0
      %p109 = por %p107, %p108
      %s110 = ssub.s32 %s13, %s20
      %p111 = scmp.eq.s32.totalorder %s110, 0
      %s113 = sadd.s32 %s112, 1
      %s114 = scalar_select %p111, %s112, %s113
      %p117 = pneg %p111
      %p118 = scmp.eq.s32.totalorder %s13, 1
      %p119 = por %p117, %p118
      %p120 = scmp.ne.s32.totalorder %s112, %s115
      %p121 = scmp.eq.s32.totalorder %s13, 0
      %p122 = por %p120, %p121
      %p123 = scmp.ne.s32.totalorder %s112, %s115
      %p124 = scmp.eq.s32.totalorder %s18, 1
      %p125 = por %p123, %p124
      %p126 = scmp.ne.s32.totalorder %s115, %s116
      %p127 = scmp.eq.s32.totalorder %s18, 0
      %p128 = por %p126, %p127
      %p129 = scmp.ne.s32.totalorder %s115, %s116
      %p130 = scmp.eq.s32.totalorder %s19, 1
      %p131 = por %p129, %p130
      %p133 = scmp.ne.s32.totalorder %s116, %s132
      %p134 = scmp.eq.s32.totalorder %s19, 0
      %p135 = por %p133, %p134
      %p136 = scmp.le.s32.totalorder 1, %s13
      %p137 = scmp.lt.s32.totalorder %s13, 3
      %p138 = pnand %p136, %p137
      %p139 = pneg %p138
      // Predicated region
      $region9: #{multicrop_forward.1} parent=5 // pred_check
        _
      $region10: #{multicrop_forward.1} parent=5 // pred_check_branch
        %141 = sbr.rel (%p138) target = $region12
      $region11: #{multicrop_forward.1} parent=5 // pred_region
        %s142 = ssub.s32 %s13, 1
        // Predicated region
        $region13: #{multicrop_forward.1} parent=11 // pred_check
          %p143 = pneg %p34
        $region14: #{multicrop_forward.1} parent=11 // pred_check_branch
          %145 = sbr.rel (%p143) target = $region16
        $region15: #{multicrop_forward.1} parent=11 // pred_region
          _
        $region16: #{multicrop_forward.1} parent=11 // pred_fallthru
          _
        // Predicated region
        $region17: #{multicrop_forward.1} parent=11 // pred_check
          %p146 = pneg %p81
        $region18: #{multicrop_forward.1} parent=11 // pred_check_branch
          %148 = sbr.rel (%p146) target = $region20
        $region19: #{multicrop_forward.1} parent=11 // pred_region
          _
        $region20: #{multicrop_forward.1} parent=11 // pred_fallthru
          _
        // Predicated region
        $region21: #{multicrop_forward.1} parent=11 // pred_check
          %p149 = pneg %p102
        $region22: #{multicrop_forward.1} parent=11 // pred_check_branch
          %151 = sbr.rel (%p149) target = $region24
        $region23: #{multicrop_forward.1} parent=11 // pred_region
          _
        $region24: #{multicrop_forward.1} parent=11 // pred_fallthru
          _
      $region12: #{multicrop_forward.1} parent=5 // pred_fallthru
        _
      %p152 = scmp.lt.s32.totalorder %s13, 2
      // Predicated region
      $region25: #{multicrop_forward.1} parent=5 // pred_check
        %p153 = pneg %p152
      $region26: #{multicrop_forward.1} parent=5 // pred_check_branch
        %155 = sbr.rel (%p153) target = $region28
      $region27: #{multicrop_forward.1} parent=5 // pred_region
        // Predicated region
        $region29: #{multicrop_forward.1} parent=27 // pred_check
          %p156 = pneg %p54
        $region30: #{multicrop_forward.1} parent=27 // pred_check_branch
          %158 = sbr.rel (%p156) target = $region32
        $region31: #{multicrop_forward.1} parent=27 // pred_region
          %s159 = smul.u32 24, %s13
          %p160 = scmp.lt.s32.totalorder %s159, 47
          %s161 = scalar_select %p160, %s159, 47
          %s162 = smul.addr %s161, 8
          %s163 = smul.addr %s162, 8
          %s164 = scalar_lea.vmem %s1, %s163
          %s165 = smul.u32 24, %s13
        $region32: #{multicrop_forward.1} parent=27 // pred_fallthru
          _
      $region28: #{multicrop_forward.1} parent=5 // pred_fallthru
        _
      %p166 = scmp.le.s32.totalorder 1, %s13
      %p167 = scmp.lt.s32.totalorder %s13, 3
      %p168 = pnand %p166, %p167
      %p169 = pneg %p168
      // Predicated region
      $region33: #{multicrop_forward.1} parent=5 // pred_check
        _
      $region34: #{multicrop_forward.1} parent=5 // pred_check_branch
        %171 = sbr.rel (%p168) target = $region36
      $region35: #{multicrop_forward.1} parent=5 // pred_region
        %s172 = ssub.s32 %s13, 1
        %p173 = pneg %p34
        %p174 = pneg %p31
        %s175 = smul.u32 24, %s18
        %p176 = scmp.lt.s32.totalorder %s175, 47
        %s177 = scalar_select %p176, %s175, 47
        %s178 = smul.addr %s177, 8
        %s179 = smul.addr %s178, 8
        %s180 = scalar_lea.vmem %s1, %s179
        %p181 = pneg %p60
        %p182 = pneg %p57
        %p183 = pneg %p81
        %p184 = pneg %p78
        %p185 = pneg %p102
        %p186 = pneg %p99
        %p187 = pneg %p128
        %p188 = pneg %p125
        %s189 = sand.u32 %s115, 1
        %s190 = scalar_lea.sflag [#allocation3], %s189
        %s191 = sand.u32 %s115, 1
        %s192 = smul.addr %s191, 48
        %s193 = scalar_lea.vmem [#allocation2], %s192
        %s194 = smul.u32 24, %s18
        %p195 = scmp.lt.s32.totalorder %s194, 47
        %s196 = scalar_select %p195, %s194, 47
        %s197 = smul.addr %s196, 8
        %s198 = smul.addr %s197, 8
        %s199 = scalar_lea.vmem %s1, %s198
        %s200 = smul.u32 24, %s18
        %s201 = smul.u32 6, %s18
        %v203 = vld [vmem:[%s199] sm:$0xff]
        %v204 = vld [vmem:[%s199 + $0x8] sm:$0xff]
        %v205 = vld [vmem:[%s199 + $0x10] sm:$0xff]
        %v206 = vld [vmem:[%s199 + $0x18] sm:$0xff]
        %v207 = vld [vmem:[%s199 + $0x20] sm:$0xff]
        %v208 = vld [vmem:[%s199 + $0x28] sm:$0xff]
        %v209 = vld [vmem:[%s199 + $0x30] sm:$0xff]
        %v210 = vld [vmem:[%s199 + $0x38] sm:$0xff]
        %v211 = vld [vmem:[%s199 + $0x40] sm:$0xff]
        %v212 = vld [vmem:[%s199 + $0x48] sm:$0xff]
        %v213 = vld [vmem:[%s199 + $0x50] sm:$0xff]
        %v214 = vld [vmem:[%s199 + $0x58] sm:$0xff]
        %v215 = vld [vmem:[%s199 + $0x60] sm:$0xff]
        %v216 = vld [vmem:[%s199 + $0x68] sm:$0xff]
        %v217 = vld [vmem:[%s199 + $0x70] sm:$0xff]
        %v218 = vld [vmem:[%s199 + $0x78] sm:$0xff]
        %v219 = vld [vmem:[%s199 + $0x80] sm:$0xff]
        %v220 = vld [vmem:[%s199 + $0x88] sm:$0xff]
        %v221 = vld [vmem:[%s199 + $0x90] sm:$0xff]
        %v222 = vld [vmem:[%s199 + $0x98] sm:$0xff]
        %v223 = vld [vmem:[%s199 + $0xa0] sm:$0xff]
        %v224 = vld [vmem:[%s199 + $0xa8] sm:$0xff]
        %v225 = vld [vmem:[%s199 + $0xb0] sm:$0xff]
        %v226 = vld [vmem:[%s199 + $0xb8] sm:$0xff]
        %v227 = vld [vmem:[%s199 + $0xc0] sm:$0xff]
        %v228 = vld [vmem:[%s199 + $0xc8] sm:$0xff]
        %v229 = vld [vmem:[%s199 + $0xd0] sm:$0xff]
        %v230 = vld [vmem:[%s199 + $0xd8] sm:$0xff]
        %v231 = vld [vmem:[%s199 + $0xe0] sm:$0xff]
        %v232 = vld [vmem:[%s199 + $0xe8] sm:$0xff]
        %v233 = vld [vmem:[%s199 + $0xf0] sm:$0xff]
        %v234 = vld [vmem:[%s199 + $0xf8] sm:$0xff]
        %v235 = vld [vmem:[%s199 + $0x100] sm:$0xff]
        %v236 = vld [vmem:[%s199 + $0x108] sm:$0xff]
        %v237 = vld [vmem:[%s199 + $0x110] sm:$0xff]
        %v238 = vld [vmem:[%s199 + $0x118] sm:$0xff]
        %v239 = vld [vmem:[%s199 + $0x120] sm:$0xff]
        %v240 = vld [vmem:[%s199 + $0x128] sm:$0xff]
        %v241 = vld [vmem:[%s199 + $0x130] sm:$0xff]
        %v242 = vld [vmem:[%s199 + $0x138] sm:$0xff]
        %v243 = vld [vmem:[%s199 + $0x140] sm:$0xff]
        %v244 = vld [vmem:[%s199 + $0x148] sm:$0xff]
        %v245 = vld [vmem:[%s199 + $0x150] sm:$0xff]
        %v246 = vld [vmem:[%s199 + $0x158] sm:$0xff]
        %v247 = vld [vmem:[%s199 + $0x160] sm:$0xff]
        %v248 = vld [vmem:[%s199 + $0x168] sm:$0xff]
        %v249 = vld [vmem:[%s199 + $0x170] sm:$0xff]
        %v250 = vld [vmem:[%s199 + $0x178] sm:$0xff]
        %v251 = vld [vmem:[%s199 + $0x180] sm:$0xff]
        %v252 = vld [vmem:[%s199 + $0x188] sm:$0xff]
        %v253 = vld [vmem:[%s199 + $0x190] sm:$0xff]
        %v254 = vld [vmem:[%s199 + $0x198] sm:$0xff]
        %v255 = vld [vmem:[%s199 + $0x1a0] sm:$0xff]
        %v256 = vld [vmem:[%s199 + $0x1a8] sm:$0xff]
        %v257 = vld [vmem:[%s199 + $0x1b0] sm:$0xff]
        %v258 = vld [vmem:[%s199 + $0x1b8] sm:$0xff]
        %v259 = vld [vmem:[%s199 + $0x1c0] sm:$0xff]
        %v260 = vld [vmem:[%s199 + $0x1c8] sm:$0xff]
        %v261 = vld [vmem:[%s199 + $0x1d0] sm:$0xff]
        %v262 = vld [vmem:[%s199 + $0x1d8] sm:$0xff]
        %v263 = vld [vmem:[%s199 + $0x1e0] sm:$0xff]
        %v264 = vld [vmem:[%s199 + $0x1e8] sm:$0xff]
        %v265 = vld [vmem:[%s199 + $0x1f0] sm:$0xff]
        %v266 = vld [vmem:[%s199 + $0x1f8] sm:$0xff]
        %v267 = vld [vmem:[%s199 + $0x200] sm:$0xff]
        %v268 = vld [vmem:[%s199 + $0x208] sm:$0xff]
        %v269 = vld [vmem:[%s199 + $0x210] sm:$0xff]
        %v270 = vld [vmem:[%s199 + $0x218] sm:$0xff]
        %v271 = vld [vmem:[%s199 + $0x220] sm:$0xff]
        %v272 = vld [vmem:[%s199 + $0x228] sm:$0xff]
        %v273 = vld [vmem:[%s199 + $0x230] sm:$0xff]
        %v274 = vld [vmem:[%s199 + $0x238] sm:$0xff]
        %v275 = vld [vmem:[%s199 + $0x240] sm:$0xff]
        %v276 = vld [vmem:[%s199 + $0x248] sm:$0xff]
        %v277 = vld [vmem:[%s199 + $0x250] sm:$0xff]
        %v278 = vld [vmem:[%s199 + $0x258] sm:$0xff]
        %v279 = vld [vmem:[%s199 + $0x260] sm:$0xff]
        %v280 = vld [vmem:[%s199 + $0x268] sm:$0xff]
        %v281 = vld [vmem:[%s199 + $0x270] sm:$0xff]
        %v282 = vld [vmem:[%s199 + $0x278] sm:$0xff]
        %v283 = vld [vmem:[%s199 + $0x280] sm:$0xff]
        %v284 = vld [vmem:[%s199 + $0x288] sm:$0xff]
        %v285 = vld [vmem:[%s199 + $0x290] sm:$0xff]
        %v286 = vld [vmem:[%s199 + $0x298] sm:$0xff]
        %v287 = vld [vmem:[%s199 + $0x2a0] sm:$0xff]
        %v288 = vld [vmem:[%s199 + $0x2a8] sm:$0xff]
        %v289 = vld [vmem:[%s199 + $0x2b0] sm:$0xff]
        %v290 = vld [vmem:[%s199 + $0x2b8] sm:$0xff]
        %v291 = vld [vmem:[%s199 + $0x2c0] sm:$0xff]
        %v292 = vld [vmem:[%s199 + $0x2c8] sm:$0xff]
        %v293 = vld [vmem:[%s199 + $0x2d0] sm:$0xff]
        %v294 = vld [vmem:[%s199 + $0x2d8] sm:$0xff]
        %v295 = vld [vmem:[%s199 + $0x2e0] sm:$0xff]
        %v296 = vld [vmem:[%s199 + $0x2e8] sm:$0xff]
        %v297 = vld [vmem:[%s199 + $0x2f0] sm:$0xff]
        %v298 = vld [vmem:[%s199 + $0x2f8] sm:$0xff]
        %v299 = vld [vmem:[%s199 + $0x300] sm:$0xff]
        %v300 = vld [vmem:[%s199 + $0x308] sm:$0xff]
        %v301 = vld [vmem:[%s199 + $0x310] sm:$0xff]
        %v302 = vld [vmem:[%s199 + $0x318] sm:$0xff]
        %v303 = vld [vmem:[%s199 + $0x320] sm:$0xff]
        %v304 = vld [vmem:[%s199 + $0x328] sm:$0xff]
        %v305 = vld [vmem:[%s199 + $0x330] sm:$0xff]
        %v306 = vld [vmem:[%s199 + $0x338] sm:$0xff]
        %v307 = vld [vmem:[%s199 + $0x340] sm:$0xff]
        %v308 = vld [vmem:[%s199 + $0x348] sm:$0xff]
        %v309 = vld [vmem:[%s199 + $0x350] sm:$0xff]
        %v310 = vld [vmem:[%s199 + $0x358] sm:$0xff]
        %v311 = vld [vmem:[%s199 + $0x360] sm:$0xff]
        %v312 = vld [vmem:[%s199 + $0x368] sm:$0xff]
        %v313 = vld [vmem:[%s199 + $0x370] sm:$0xff]
        %v314 = vld [vmem:[%s199 + $0x378] sm:$0xff]
        %v315 = vld [vmem:[%s199 + $0x380] sm:$0xff]
        %v316 = vld [vmem:[%s199 + $0x388] sm:$0xff]
        %v317 = vld [vmem:[%s199 + $0x390] sm:$0xff]
        %v318 = vld [vmem:[%s199 + $0x398] sm:$0xff]
        %v319 = vld [vmem:[%s199 + $0x3a0] sm:$0xff]
        %v320 = vld [vmem:[%s199 + $0x3a8] sm:$0xff]
        %v321 = vld [vmem:[%s199 + $0x3b0] sm:$0xff]
        %v322 = vld [vmem:[%s199 + $0x3b8] sm:$0xff]
        %v323 = vld [vmem:[%s199 + $0x3c0] sm:$0xff]
        %v324 = vld [vmem:[%s199 + $0x3c8] sm:$0xff]
        %v325 = vld [vmem:[%s199 + $0x3d0] sm:$0xff]
        %v326 = vld [vmem:[%s199 + $0x3d8] sm:$0xff]
        %v327 = vld [vmem:[%s199 + $0x3e0] sm:$0xff]
        %v328 = vld [vmem:[%s199 + $0x3e8] sm:$0xff]
        %v329 = vld [vmem:[%s199 + $0x3f0] sm:$0xff]
        %v330 = vld [vmem:[%s199 + $0x3f8] sm:$0xff]
        %v331 = vld [vmem:[%s199 + $0x400] sm:$0xff]
        %v332 = vld [vmem:[%s199 + $0x408] sm:$0xff]
        %v333 = vld [vmem:[%s199 + $0x410] sm:$0xff]
        %v334 = vld [vmem:[%s199 + $0x418] sm:$0xff]
        %v335 = vld [vmem:[%s199 + $0x420] sm:$0xff]
        %v336 = vld [vmem:[%s199 + $0x428] sm:$0xff]
        %v337 = vld [vmem:[%s199 + $0x430] sm:$0xff]
        %v338 = vld [vmem:[%s199 + $0x438] sm:$0xff]
        %v339 = vld [vmem:[%s199 + $0x440] sm:$0xff]
        %v340 = vld [vmem:[%s199 + $0x448] sm:$0xff]
        %v341 = vld [vmem:[%s199 + $0x450] sm:$0xff]
        %v342 = vld [vmem:[%s199 + $0x458] sm:$0xff]
        %v343 = vld [vmem:[%s199 + $0x460] sm:$0xff]
        %v344 = vld [vmem:[%s199 + $0x468] sm:$0xff]
        %v345 = vld [vmem:[%s199 + $0x470] sm:$0xff]
        %v346 = vld [vmem:[%s199 + $0x478] sm:$0xff]
        %v347 = vld [vmem:[%s199 + $0x480] sm:$0xff]
        %v348 = vld [vmem:[%s199 + $0x488] sm:$0xff]
        %v349 = vld [vmem:[%s199 + $0x490] sm:$0xff]
        %v350 = vld [vmem:[%s199 + $0x498] sm:$0xff]
        %v351 = vld [vmem:[%s199 + $0x4a0] sm:$0xff]
        %v352 = vld [vmem:[%s199 + $0x4a8] sm:$0xff]
        %v353 = vld [vmem:[%s199 + $0x4b0] sm:$0xff]
        %v354 = vld [vmem:[%s199 + $0x4b8] sm:$0xff]
        %v355 = vld [vmem:[%s199 + $0x4c0] sm:$0xff]
        %v356 = vld [vmem:[%s199 + $0x4c8] sm:$0xff]
        %v357 = vld [vmem:[%s199 + $0x4d0] sm:$0xff]
        %v358 = vld [vmem:[%s199 + $0x4d8] sm:$0xff]
        %v359 = vld [vmem:[%s199 + $0x4e0] sm:$0xff]
        %v360 = vld [vmem:[%s199 + $0x4e8] sm:$0xff]
        %v361 = vld [vmem:[%s199 + $0x4f0] sm:$0xff]
        %v362 = vld [vmem:[%s199 + $0x4f8] sm:$0xff]
        %v363 = vld [vmem:[%s199 + $0x500] sm:$0xff]
        %v364 = vld [vmem:[%s199 + $0x508] sm:$0xff]
        %v365 = vld [vmem:[%s199 + $0x510] sm:$0xff]
        %v366 = vld [vmem:[%s199 + $0x518] sm:$0xff]
        %v367 = vld [vmem:[%s199 + $0x520] sm:$0xff]
        %v368 = vld [vmem:[%s199 + $0x528] sm:$0xff]
        %v369 = vld [vmem:[%s199 + $0x530] sm:$0xff]
        %v370 = vld [vmem:[%s199 + $0x538] sm:$0xff]
        %v371 = vld [vmem:[%s199 + $0x540] sm:$0xff]
        %v372 = vld [vmem:[%s199 + $0x548] sm:$0xff]
        %v373 = vld [vmem:[%s199 + $0x550] sm:$0xff]
        %v374 = vld [vmem:[%s199 + $0x558] sm:$0xff]
        %v375 = vld [vmem:[%s199 + $0x560] sm:$0xff]
        %v376 = vld [vmem:[%s199 + $0x568] sm:$0xff]
        %v377 = vld [vmem:[%s199 + $0x570] sm:$0xff]
        %v378 = vld [vmem:[%s199 + $0x578] sm:$0xff]
        %v379 = vld [vmem:[%s199 + $0x580] sm:$0xff]
        %v380 = vld [vmem:[%s199 + $0x588] sm:$0xff]
        %v381 = vld [vmem:[%s199 + $0x590] sm:$0xff]
        %v382 = vld [vmem:[%s199 + $0x598] sm:$0xff]
        %v383 = vld [vmem:[%s199 + $0x5a0] sm:$0xff]
        %v384 = vld [vmem:[%s199 + $0x5a8] sm:$0xff]
        %v385 = vld [vmem:[%s199 + $0x5b0] sm:$0xff]
        %v386 = vld [vmem:[%s199 + $0x5b8] sm:$0xff]
        %v387 = vld [vmem:[%s199 + $0x5c0] sm:$0xff]
        %v388 = vld [vmem:[%s199 + $0x5c8] sm:$0xff]
        %v389 = vld [vmem:[%s199 + $0x5d0] sm:$0xff]
        %v390 = vld [vmem:[%s199 + $0x5d8] sm:$0xff]
        %v391 = vld [vmem:[%s199 + $0x5e0] sm:$0xff]
        %v392 = vld [vmem:[%s199 + $0x5e8] sm:$0xff]
        %v393 = vld [vmem:[%s199 + $0x5f0] sm:$0xff]
        %v394 = vld [vmem:[%s199 + $0x5f8] sm:$0xff]
        %v395 = vpack.c.bf16 %v211, %v203
        %v396 = vpack.c.bf16 %v212, %v204
        %v397 = vpack.c.bf16 %v213, %v205
        %v398 = vpack.c.bf16 %v214, %v206
        %v399 = vpack.c.bf16 %v215, %v207
        %v400 = vpack.c.bf16 %v216, %v208
        %v401 = vpack.c.bf16 %v217, %v209
        %v402 = vpack.c.bf16 %v218, %v210
        %v403 = vpack.c.bf16 %v227, %v219
        %v404 = vpack.c.bf16 %v228, %v220
        %v405 = vpack.c.bf16 %v229, %v221
        %v406 = vpack.c.bf16 %v230, %v222
        %v407 = vpack.c.bf16 %v231, %v223
        %v408 = vpack.c.bf16 %v232, %v224
        %v409 = vpack.c.bf16 %v233, %v225
        %v410 = vpack.c.bf16 %v234, %v226
        %v411 = vpack.c.bf16 %v243, %v235
        %v412 = vpack.c.bf16 %v244, %v236
        %v413 = vpack.c.bf16 %v245, %v237
        %v414 = vpack.c.bf16 %v246, %v238
        %v415 = vpack.c.bf16 %v247, %v239
        %v416 = vpack.c.bf16 %v248, %v240
        %v417 = vpack.c.bf16 %v249, %v241
        %v418 = vpack.c.bf16 %v250, %v242
        %v419 = vpack.c.bf16 %v259, %v251
        %v420 = vpack.c.bf16 %v260, %v252
        %v421 = vpack.c.bf16 %v261, %v253
        %v422 = vpack.c.bf16 %v262, %v254
        %v423 = vpack.c.bf16 %v263, %v255
        %v424 = vpack.c.bf16 %v264, %v256
        %v425 = vpack.c.bf16 %v265, %v257
        %v426 = vpack.c.bf16 %v266, %v258
        %v427 = vpack.c.bf16 %v275, %v267
        %v428 = vpack.c.bf16 %v276, %v268
        %v429 = vpack.c.bf16 %v277, %v269
        %v430 = vpack.c.bf16 %v278, %v270
        %v431 = vpack.c.bf16 %v279, %v271
        %v432 = vpack.c.bf16 %v280, %v272
        %v433 = vpack.c.bf16 %v281, %v273
        %v434 = vpack.c.bf16 %v282, %v274
        %v435 = vpack.c.bf16 %v291, %v283
        %v436 = vpack.c.bf16 %v292, %v284
        %v437 = vpack.c.bf16 %v293, %v285
        %v438 = vpack.c.bf16 %v294, %v286
        %v439 = vpack.c.bf16 %v295, %v287
        %v440 = vpack.c.bf16 %v296, %v288
        %v441 = vpack.c.bf16 %v297, %v289
        %v442 = vpack.c.bf16 %v298, %v290
        %v443 = vpack.c.bf16 %v307, %v299
        %v444 = vpack.c.bf16 %v308, %v300
        %v445 = vpack.c.bf16 %v309, %v301
        %v446 = vpack.c.bf16 %v310, %v302
        %v447 = vpack.c.bf16 %v311, %v303
        %v448 = vpack.c.bf16 %v312, %v304
        %v449 = vpack.c.bf16 %v313, %v305
        %v450 = vpack.c.bf16 %v314, %v306
        %v451 = vpack.c.bf16 %v323, %v315
        %v452 = vpack.c.bf16 %v324, %v316
        %v453 = vpack.c.bf16 %v325, %v317
        %v454 = vpack.c.bf16 %v326, %v318
        %v455 = vpack.c.bf16 %v327, %v319
        %v456 = vpack.c.bf16 %v328, %v320
        %v457 = vpack.c.bf16 %v329, %v321
        %v458 = vpack.c.bf16 %v330, %v322
        %v459 = vpack.c.bf16 %v339, %v331
        %v460 = vpack.c.bf16 %v340, %v332
        %v461 = vpack.c.bf16 %v341, %v333
        %v462 = vpack.c.bf16 %v342, %v334
        %v463 = vpack.c.bf16 %v343, %v335
        %v464 = vpack.c.bf16 %v344, %v336
        %v465 = vpack.c.bf16 %v345, %v337
        %v466 = vpack.c.bf16 %v346, %v338
        %v467 = vpack.c.bf16 %v355, %v347
        %v468 = vpack.c.bf16 %v356, %v348
        %v469 = vpack.c.bf16 %v357, %v349
        %v470 = vpack.c.bf16 %v358, %v350
        %v471 = vpack.c.bf16 %v359, %v351
        %v472 = vpack.c.bf16 %v360, %v352
        %v473 = vpack.c.bf16 %v361, %v353
        %v474 = vpack.c.bf16 %v362, %v354
        %v475 = vpack.c.bf16 %v371, %v363
        %v476 = vpack.c.bf16 %v372, %v364
        %v477 = vpack.c.bf16 %v373, %v365
        %v478 = vpack.c.bf16 %v374, %v366
        %v479 = vpack.c.bf16 %v375, %v367
        %v480 = vpack.c.bf16 %v376, %v368
        %v481 = vpack.c.bf16 %v377, %v369
        %v482 = vpack.c.bf16 %v378, %v370
        %v483 = vpack.c.bf16 %v387, %v379
        %v484 = vpack.c.bf16 %v388, %v380
        %v485 = vpack.c.bf16 %v389, %v381
        %v486 = vpack.c.bf16 %v390, %v382
        %v487 = vpack.c.bf16 %v391, %v383
        %v488 = vpack.c.bf16 %v392, %v384
        %v489 = vpack.c.bf16 %v393, %v385
        %v490 = vpack.c.bf16 %v394, %v386
        %v491 = vld [vmem:[%s2] sm:$0xf]
        %v492 = vld [vmem:[%s2 + $0x4] sm:$0xf]
        %v493 = vld [vmem:[%s2 + $0x8] sm:$0xf]
        %v494 = vld [vmem:[%s2 + $0xc] sm:$0xf]
        %v495 = vld [vmem:[%s2 + $0x10] sm:$0xf]
        %v496 = vld [vmem:[%s2 + $0x14] sm:$0xf]
        %v497 = vld [vmem:[%s2 + $0x18] sm:$0xf]
        %v498 = vld [vmem:[%s2 + $0x1c] sm:$0xf]
        %v499 = vld [vmem:[%s2 + $0x20] sm:$0xf]
        %v500 = vld [vmem:[%s2 + $0x24] sm:$0xf]
        %v501 = vld [vmem:[%s2 + $0x28] sm:$0xf]
        %v502 = vld [vmem:[%s2 + $0x2c] sm:$0xf]
        %v503 = vld [vmem:[%s2 + $0x30] sm:$0xf]
        %v504 = vld [vmem:[%s2 + $0x34] sm:$0xf]
        %v505 = vld [vmem:[%s2 + $0x38] sm:$0xf]
        %v506 = vld [vmem:[%s2 + $0x3c] sm:$0xf]
        %v507 = vld [vmem:[%s2 + $0x40] sm:$0xf]
        %v508 = vld [vmem:[%s2 + $0x44] sm:$0xf]
        %v509 = vld [vmem:[%s2 + $0x48] sm:$0xf]
        %v510 = vld [vmem:[%s2 + $0x4c] sm:$0xf]
        %v511 = vld [vmem:[%s2 + $0x50] sm:$0xf]
        %v512 = vld [vmem:[%s2 + $0x54] sm:$0xf]
        %v513 = vld [vmem:[%s2 + $0x58] sm:$0xf]
        %v514 = vld [vmem:[%s2 + $0x5c] sm:$0xf]
        %v515 = vld [vmem:[%s2 + $0x60] sm:$0xf]
        %v516 = vld [vmem:[%s2 + $0x64] sm:$0xf]
        %v517 = vld [vmem:[%s2 + $0x68] sm:$0xf]
        %v518 = vld [vmem:[%s2 + $0x6c] sm:$0xf]
        %v519 = vld [vmem:[%s2 + $0x70] sm:$0xf]
        %v520 = vld [vmem:[%s2 + $0x74] sm:$0xf]
        %v521 = vld [vmem:[%s2 + $0x78] sm:$0xf]
        %v522 = vld [vmem:[%s2 + $0x7c] sm:$0xf]
        %v523 = vld [vmem:[%s2 + $0x80] sm:$0xf]
        %v524 = vld [vmem:[%s2 + $0x84] sm:$0xf]
        %v525 = vld [vmem:[%s2 + $0x88] sm:$0xf]
        %v526 = vld [vmem:[%s2 + $0x8c] sm:$0xf]
        %v527 = vld [vmem:[%s2 + $0x90] sm:$0xf]
        %v528 = vld [vmem:[%s2 + $0x94] sm:$0xf]
        %v529 = vld [vmem:[%s2 + $0x98] sm:$0xf]
        %v530 = vld [vmem:[%s2 + $0x9c] sm:$0xf]
        %v531 = vld [vmem:[%s2 + $0xa0] sm:$0xf]
        %v532 = vld [vmem:[%s2 + $0xa4] sm:$0xf]
        %v533 = vld [vmem:[%s2 + $0xa8] sm:$0xf]
        %v534 = vld [vmem:[%s2 + $0xac] sm:$0xf]
        %v535 = vld [vmem:[%s2 + $0xb0] sm:$0xf]
        %v536 = vld [vmem:[%s2 + $0xb4] sm:$0xf]
        %v537 = vld [vmem:[%s2 + $0xb8] sm:$0xf]
        %v538 = vld [vmem:[%s2 + $0xbc] sm:$0xf]
        %v539 = vld [vmem:[%s2 + $0xc0] sm:$0xf]
        %v540 = vld [vmem:[%s2 + $0xc4] sm:$0xf]
        %v541 = vld [vmem:[%s2 + $0xc8] sm:$0xf]
        %v542 = vld [vmem:[%s2 + $0xcc] sm:$0xf]
        %v543 = vld [vmem:[%s2 + $0xd0] sm:$0xf]
        %v544 = vld [vmem:[%s2 + $0xd4] sm:$0xf]
        %v545 = vld [vmem:[%s2 + $0xd8] sm:$0xf]
        %v546 = vld [vmem:[%s2 + $0xdc] sm:$0xf]
        %v547 = vld [vmem:[%s2 + $0xe0] sm:$0xf]
        %v548 = vld [vmem:[%s2 + $0xe4] sm:$0xf]
        %v549 = vld [vmem:[%s2 + $0xe8] sm:$0xf]
        %v550 = vld [vmem:[%s2 + $0xec] sm:$0xf]
        %v551 = vld [vmem:[%s2 + $0xf0] sm:$0xf]
        %v552 = vld [vmem:[%s2 + $0xf4] sm:$0xf]
        %v553 = vld [vmem:[%s2 + $0xf8] sm:$0xf]
        %v554 = vld [vmem:[%s2 + $0xfc] sm:$0xf]
        %v555 = vld [vmem:[%s2 + $0x100] sm:$0xf]
        %v556 = vld [vmem:[%s2 + $0x104] sm:$0xf]
        %v557 = vld [vmem:[%s2 + $0x108] sm:$0xf]
        %v558 = vld [vmem:[%s2 + $0x10c] sm:$0xf]
        %v559 = vld [vmem:[%s2 + $0x110] sm:$0xf]
        %v560 = vld [vmem:[%s2 + $0x114] sm:$0xf]
        %v561 = vld [vmem:[%s2 + $0x118] sm:$0xf]
        %v562 = vld [vmem:[%s2 + $0x11c] sm:$0xf]
        %v563 = vld [vmem:[%s2 + $0x120] sm:$0xf]
        %v564 = vld [vmem:[%s2 + $0x124] sm:$0xf]
        %v565 = vld [vmem:[%s2 + $0x128] sm:$0xf]
        %v566 = vld [vmem:[%s2 + $0x12c] sm:$0xf]
        %v567 = vld [vmem:[%s2 + $0x130] sm:$0xf]
        %v568 = vld [vmem:[%s2 + $0x134] sm:$0xf]
        %v569 = vld [vmem:[%s2 + $0x138] sm:$0xf]
        %v570 = vld [vmem:[%s2 + $0x13c] sm:$0xf]
        %v571 = vld [vmem:[%s2 + $0x140] sm:$0xf]
        %v572 = vld [vmem:[%s2 + $0x144] sm:$0xf]
        %v573 = vld [vmem:[%s2 + $0x148] sm:$0xf]
        %v574 = vld [vmem:[%s2 + $0x14c] sm:$0xf]
        %v575 = vld [vmem:[%s2 + $0x150] sm:$0xf]
        %v576 = vld [vmem:[%s2 + $0x154] sm:$0xf]
        %v577 = vld [vmem:[%s2 + $0x158] sm:$0xf]
        %v578 = vld [vmem:[%s2 + $0x15c] sm:$0xf]
        %v579 = vld [vmem:[%s2 + $0x160] sm:$0xf]
        %v580 = vld [vmem:[%s2 + $0x164] sm:$0xf]
        %v581 = vld [vmem:[%s2 + $0x168] sm:$0xf]
        %v582 = vld [vmem:[%s2 + $0x16c] sm:$0xf]
        %v583 = vld [vmem:[%s2 + $0x170] sm:$0xf]
        %v584 = vld [vmem:[%s2 + $0x174] sm:$0xf]
        %v585 = vld [vmem:[%s2 + $0x178] sm:$0xf]
        %v586 = vld [vmem:[%s2 + $0x17c] sm:$0xf]
        %v587 = vld [vmem:[%s2 + $0x180] sm:$0xf]
        %v588 = vld [vmem:[%s2 + $0x184] sm:$0xf]
        %v589 = vld [vmem:[%s2 + $0x188] sm:$0xf]
        %v590 = vld [vmem:[%s2 + $0x18c] sm:$0xf]
        %v591 = vld [vmem:[%s2 + $0x190] sm:$0xf]
        %v592 = vld [vmem:[%s2 + $0x194] sm:$0xf]
        %v593 = vld [vmem:[%s2 + $0x198] sm:$0xf]
        %v594 = vld [vmem:[%s2 + $0x19c] sm:$0xf]
        %v595 = vld [vmem:[%s2 + $0x1a0] sm:$0xf]
        %v596 = vld [vmem:[%s2 + $0x1a4] sm:$0xf]
        %v597 = vld [vmem:[%s2 + $0x1a8] sm:$0xf]
        %v598 = vld [vmem:[%s2 + $0x1ac] sm:$0xf]
        %v599 = vld [vmem:[%s2 + $0x1b0] sm:$0xf]
        %v600 = vld [vmem:[%s2 + $0x1b4] sm:$0xf]
        %v601 = vld [vmem:[%s2 + $0x1b8] sm:$0xf]
        %v602 = vld [vmem:[%s2 + $0x1bc] sm:$0xf]
        %v603 = vld [vmem:[%s2 + $0x1c0] sm:$0xf]
        %v604 = vld [vmem:[%s2 + $0x1c4] sm:$0xf]
        %v605 = vld [vmem:[%s2 + $0x1c8] sm:$0xf]
        %v606 = vld [vmem:[%s2 + $0x1cc] sm:$0xf]
        %v607 = vld [vmem:[%s2 + $0x1d0] sm:$0xf]
        %v608 = vld [vmem:[%s2 + $0x1d4] sm:$0xf]
        %v609 = vld [vmem:[%s2 + $0x1d8] sm:$0xf]
        %v610 = vld [vmem:[%s2 + $0x1dc] sm:$0xf]
        %v611 = vld [vmem:[%s2 + $0x1e0] sm:$0xf]
        %v612 = vld [vmem:[%s2 + $0x1e4] sm:$0xf]
        %v613 = vld [vmem:[%s2 + $0x1e8] sm:$0xf]
        %v614 = vld [vmem:[%s2 + $0x1ec] sm:$0xf]
        %v615 = vld [vmem:[%s2 + $0x1f0] sm:$0xf]
        %v616 = vld [vmem:[%s2 + $0x1f4] sm:$0xf]
        %v617 = vld [vmem:[%s2 + $0x1f8] sm:$0xf]
        %v618 = vld [vmem:[%s2 + $0x1fc] sm:$0xf]
        %v747 = vunpack.c.l.b16 %v491
        %v748 = vunpack.c.l.b16 %v492
        %v749 = vunpack.c.l.b16 %v493
        %v750 = vunpack.c.l.b16 %v494
        %v751 = vunpack.c.l.b16 %v495
        %v752 = vunpack.c.l.b16 %v496
        %v753 = vunpack.c.l.b16 %v497
        %v754 = vunpack.c.l.b16 %v498
        %v755 = vunpack.c.l.b16 %v499
        %v756 = vunpack.c.l.b16 %v500
        %v757 = vunpack.c.l.b16 %v501
        %v758 = vunpack.c.l.b16 %v502
        %v759 = vunpack.c.l.b16 %v503
        %v760 = vunpack.c.l.b16 %v504
        %v761 = vunpack.c.l.b16 %v505
        %v762 = vunpack.c.l.b16 %v506
        %v763 = vunpack.c.l.b16 %v507
        %v764 = vunpack.c.l.b16 %v508
        %v765 = vunpack.c.l.b16 %v509
        %v766 = vunpack.c.l.b16 %v510
        %v767 = vunpack.c.l.b16 %v511
        %v768 = vunpack.c.l.b16 %v512
        %v769 = vunpack.c.l.b16 %v513
        %v770 = vunpack.c.l.b16 %v514
        %v771 = vunpack.c.l.b16 %v515
        %v772 = vunpack.c.l.b16 %v516
        %v773 = vunpack.c.l.b16 %v517
        %v774 = vunpack.c.l.b16 %v518
        %v775 = vunpack.c.l.b16 %v519
        %v776 = vunpack.c.l.b16 %v520
        %v777 = vunpack.c.l.b16 %v521
        %v778 = vunpack.c.l.b16 %v522
        %v779 = vunpack.c.l.b16 %v523
        %v780 = vunpack.c.l.b16 %v524
        %v781 = vunpack.c.l.b16 %v525
        %v782 = vunpack.c.l.b16 %v526
        %v783 = vunpack.c.l.b16 %v527
        %v784 = vunpack.c.l.b16 %v528
        %v785 = vunpack.c.l.b16 %v529
        %v786 = vunpack.c.l.b16 %v530
        %v787 = vunpack.c.l.b16 %v531
        %v788 = vunpack.c.l.b16 %v532
        %v789 = vunpack.c.l.b16 %v533
        %v790 = vunpack.c.l.b16 %v534
        %v791 = vunpack.c.l.b16 %v535
        %v792 = vunpack.c.l.b16 %v536
        %v793 = vunpack.c.l.b16 %v537
        %v794 = vunpack.c.l.b16 %v538
        %v795 = vunpack.c.l.b16 %v539
        %v796 = vunpack.c.l.b16 %v540
        %v797 = vunpack.c.l.b16 %v541
        %v798 = vunpack.c.l.b16 %v542
        %v799 = vunpack.c.l.b16 %v543
        %v800 = vunpack.c.l.b16 %v544
        %v801 = vunpack.c.l.b16 %v545
        %v802 = vunpack.c.l.b16 %v546
        %v803 = vunpack.c.l.b16 %v547
        %v804 = vunpack.c.l.b16 %v548
        %v805 = vunpack.c.l.b16 %v549
        %v806 = vunpack.c.l.b16 %v550
        %v807 = vunpack.c.l.b16 %v551
        %v808 = vunpack.c.l.b16 %v552
        %v809 = vunpack.c.l.b16 %v553
        %v810 = vunpack.c.l.b16 %v554
        %v811 = vunpack.c.l.b16 %v555
        %v812 = vunpack.c.l.b16 %v556
        %v813 = vunpack.c.l.b16 %v557
        %v814 = vunpack.c.l.b16 %v558
        %v815 = vunpack.c.l.b16 %v559
        %v816 = vunpack.c.l.b16 %v560
        %v817 = vunpack.c.l.b16 %v561
        %v818 = vunpack.c.l.b16 %v562
        %v819 = vunpack.c.l.b16 %v563
        %v820 = vunpack.c.l.b16 %v564
        %v821 = vunpack.c.l.b16 %v565
        %v822 = vunpack.c.l.b16 %v566
        %v823 = vunpack.c.l.b16 %v567
        %v824 = vunpack.c.l.b16 %v568
        %v825 = vunpack.c.l.b16 %v569
        %v826 = vunpack.c.l.b16 %v570
        %v827 = vunpack.c.l.b16 %v571
        %v828 = vunpack.c.l.b16 %v572
        %v829 = vunpack.c.l.b16 %v573
        %v830 = vunpack.c.l.b16 %v574
        %v831 = vunpack.c.l.b16 %v575
        %v832 = vunpack.c.l.b16 %v576
        %v833 = vunpack.c.l.b16 %v577
        %v834 = vunpack.c.l.b16 %v578
        %v835 = vunpack.c.l.b16 %v579
        %v836 = vunpack.c.l.b16 %v580
        %v837 = vunpack.c.l.b16 %v581
        %v838 = vunpack.c.l.b16 %v582
        %v839 = vunpack.c.l.b16 %v583
        %v840 = vunpack.c.l.b16 %v584
        %v841 = vunpack.c.l.b16 %v585
        %v842 = vunpack.c.l.b16 %v586
        %v843 = vunpack.c.l.b16 %v587
        %v844 = vunpack.c.l.b16 %v588
        %v845 = vunpack.c.l.b16 %v589
        %v846 = vunpack.c.l.b16 %v590
        %v847 = vunpack.c.l.b16 %v591
        %v848 = vunpack.c.l.b16 %v592
        %v849 = vunpack.c.l.b16 %v593
        %v850 = vunpack.c.l.b16 %v594
        %v851 = vunpack.c.l.b16 %v595
        %v852 = vunpack.c.l.b16 %v596
        %v853 = vunpack.c.l.b16 %v597
        %v854 = vunpack.c.l.b16 %v598
        %v855 = vunpack.c.l.b16 %v599
        %v856 = vunpack.c.l.b16 %v600
        %v857 = vunpack.c.l.b16 %v601
        %v858 = vunpack.c.l.b16 %v602
        %v859 = vunpack.c.l.b16 %v603
        %v860 = vunpack.c.l.b16 %v604
        %v861 = vunpack.c.l.b16 %v605
        %v862 = vunpack.c.l.b16 %v606
        %v863 = vunpack.c.l.b16 %v607
        %v864 = vunpack.c.l.b16 %v608
        %v865 = vunpack.c.l.b16 %v609
        %v866 = vunpack.c.l.b16 %v610
        %v867 = vunpack.c.l.b16 %v611
        %v868 = vunpack.c.l.b16 %v612
        %v869 = vunpack.c.l.b16 %v613
        %v870 = vunpack.c.l.b16 %v614
        %v871 = vunpack.c.l.b16 %v615
        %v872 = vunpack.c.l.b16 %v616
        %v873 = vunpack.c.l.b16 %v617
        %v874 = vunpack.c.l.b16 %v618
        %v875 = vpack.c.b16 %v748, %v747
        %v876 = vpack.c.b16 %v750, %v749
        %v877 = vpack.c.b16 %v752, %v751
        %v878 = vpack.c.b16 %v754, %v753
        %v879 = vpack.c.b16 %v756, %v755
        %v880 = vpack.c.b16 %v758, %v757
        %v881 = vpack.c.b16 %v760, %v759
        %v882 = vpack.c.b16 %v762, %v761
        %v883 = vpack.c.b16 %v764, %v763
        %v884 = vpack.c.b16 %v766, %v765
        %v885 = vpack.c.b16 %v768, %v767
        %v886 = vpack.c.b16 %v770, %v769
        %v887 = vpack.c.b16 %v772, %v771
        %v888 = vpack.c.b16 %v774, %v773
        %v889 = vpack.c.b16 %v776, %v775
        %v890 = vpack.c.b16 %v778, %v777
        %v891 = vpack.c.b16 %v780, %v779
        %v892 = vpack.c.b16 %v782, %v781
        %v893 = vpack.c.b16 %v784, %v783
        %v894 = vpack.c.b16 %v786, %v785
        %v895 = vpack.c.b16 %v788, %v787
        %v896 = vpack.c.b16 %v790, %v789
        %v897 = vpack.c.b16 %v792, %v791
        %v898 = vpack.c.b16 %v794, %v793
        %v899 = vpack.c.b16 %v796, %v795
        %v900 = vpack.c.b16 %v798, %v797
        %v901 = vpack.c.b16 %v800, %v799
        %v902 = vpack.c.b16 %v802, %v801
        %v903 = vpack.c.b16 %v804, %v803
        %v904 = vpack.c.b16 %v806, %v805
        %v905 = vpack.c.b16 %v808, %v807
        %v906 = vpack.c.b16 %v810, %v809
        %v907 = vpack.c.b16 %v812, %v811
        %v908 = vpack.c.b16 %v814, %v813
        %v909 = vpack.c.b16 %v816, %v815
        %v910 = vpack.c.b16 %v818, %v817
        %v911 = vpack.c.b16 %v820, %v819
        %v912 = vpack.c.b16 %v822, %v821
        %v913 = vpack.c.b16 %v824, %v823
        %v914 = vpack.c.b16 %v826, %v825
        %v915 = vpack.c.b16 %v828, %v827
        %v916 = vpack.c.b16 %v830, %v829
        %v917 = vpack.c.b16 %v832, %v831
        %v918 = vpack.c.b16 %v834, %v833
        %v919 = vpack.c.b16 %v836, %v835
        %v920 = vpack.c.b16 %v838, %v837
        %v921 = vpack.c.b16 %v840, %v839
        %v922 = vpack.c.b16 %v842, %v841
        %v923 = vpack.c.b16 %v844, %v843
        %v924 = vpack.c.b16 %v846, %v845
        %v925 = vpack.c.b16 %v848, %v847
        %v926 = vpack.c.b16 %v850, %v849
        %v927 = vpack.c.b16 %v852, %v851
        %v928 = vpack.c.b16 %v854, %v853
        %v929 = vpack.c.b16 %v856, %v855
        %v930 = vpack.c.b16 %v858, %v857
        %v931 = vpack.c.b16 %v860, %v859
        %v932 = vpack.c.b16 %v862, %v861
        %v933 = vpack.c.b16 %v864, %v863
        %v934 = vpack.c.b16 %v866, %v865
        %v935 = vpack.c.b16 %v868, %v867
        %v936 = vpack.c.b16 %v870, %v869
        %v937 = vpack.c.b16 %v872, %v871
        %v938 = vpack.c.b16 %v874, %v873
        %1003 = vmatprep.subr.bf16.mxu0 0
        %1004 = vmatpush1.bf16.msra.mxu0 %v875
        %1005 = vmatprep.subr.bf16.mxu0 0
        %1006 = vmatpush1.bf16.msra.mxu0 %v876
        %1007 = vmatprep.subr.bf16.mxu0 0
        %1008 = vmatpush1.bf16.msra.mxu0 %v877
        %1009 = vmatprep.subr.bf16.mxu0 0
        %1010 = vmatpush1.bf16.msra.mxu0 %v878
        %1011 = vmatprep.subr.bf16.mxu0 0
        %1012 = vmatpush1.bf16.msra.mxu0 %v879
        %1013 = vmatprep.subr.bf16.mxu0 0
        %1014 = vmatpush1.bf16.msra.mxu0 %v880
        %1015 = vmatprep.subr.bf16.mxu0 0
        %1016 = vmatpush1.bf16.msra.mxu0 %v881
        %1017 = vmatprep.subr.bf16.mxu0 0
        %1018 = vmatpush1.bf16.msra.mxu0 %v882
        %1019 = vmatprep.subr.bf16.mxu0 0
        %1020 = vmatpush1.bf16.msra.mxu0 %v883
        %1021 = vmatprep.subr.bf16.mxu0 0
        %1022 = vmatpush1.bf16.msra.mxu0 %v884
        %1023 = vmatprep.subr.bf16.mxu0 0
        %1024 = vmatpush1.bf16.msra.mxu0 %v885
        %1025 = vmatprep.subr.bf16.mxu0 0
        %1026 = vmatpush1.bf16.msra.mxu0 %v886
        %1027 = vmatprep.subr.bf16.mxu0 0
        %1028 = vmatpush1.bf16.msra.mxu0 %v887
        %1029 = vmatprep.subr.bf16.mxu0 0
        %1030 = vmatpush1.bf16.msra.mxu0 %v888
        %1031 = vmatprep.subr.bf16.mxu0 0
        %1032 = vmatpush1.bf16.msra.mxu0 %v889
        %1033 = vmatprep.subr.bf16.mxu0 0
        %1034 = vmatpush1.bf16.msra.mxu0 %v890
        %1035 = vmatprep.mubr.bf16.mxu0 %v396
        %1036 = vmatmul.mubr.bf16.gmra.mrb[0].mxu0 %v395
        %v1037 = vpop.f32.mrb[0].mxu0
        %v1038 = vadd.f32 0.0, %v1037
        %v1039 = vpop.f32.mrb[0].mxu0
        %v1040 = vpop.f32.mrb[0].mxu0
        %v1041 = vadd.f32 0.0, %v1040
        %v1042 = vpop.f32.mrb[0].mxu0
        %1043 = vmatprep.mubr.bf16.mxu0 %v404
        %1044 = vmatmul.mubr.bf16.gmra.mrb[0].mxu0 %v403
        %v1045 = vpop.f32.mrb[0].mxu0
        %v1046 = vadd.f32 0.0, %v1045
        %v1047 = vpop.f32.mrb[0].mxu0
        %v1048 = vpop.f32.mrb[0].mxu0
        %v1049 = vadd.f32 0.0, %v1048
        %v1050 = vpop.f32.mrb[0].mxu0
        %1051 = vmatprep.mubr.bf16.mxu0 %v412
        %1052 = vmatmul.mubr.bf16.gmra.mrb[0].mxu0 %v411
        %v1053 = vpop.f32.mrb[0].mxu0
        %v1054 = vadd.f32 0.0, %v1053
        %v1055 = vpop.f32.mrb[0].mxu0
        %v1056 = vpop.f32.mrb[0].mxu0
        %v1057 = vadd.f32 0.0, %v1056
        %v1058 = vpop.f32.mrb[0].mxu0
        %1059 = vmatprep.mubr.bf16.mxu0 %v420
        %1060 = vmatmul.mubr.bf16.gmra.mrb[0].mxu0 %v419
        %v1061 = vpop.f32.mrb[0].mxu0
        %v1062 = vadd.f32 0.0, %v1061
        %v1063 = vpop.f32.mrb[0].mxu0
        %v1064 = vpop.f32.mrb[0].mxu0
        %v1065 = vadd.f32 0.0, %v1064
        %v1066 = vpop.f32.mrb[0].mxu0
        %1067 = vmatprep.mubr.bf16.mxu0 %v428
        %1068 = vmatmul.mubr.bf16.gmra.mrb[0].mxu0 %v427
        %v1069 = vpop.f32.mrb[0].mxu0
        %v1070 = vadd.f32 0.0, %v1069
        %v1071 = vpop.f32.mrb[0].mxu0
        %v1072 = vpop.f32.mrb[0].mxu0
        %v1073 = vadd.f32 0.0, %v1072
        %v1074 = vpop.f32.mrb[0].mxu0
        %1075 = vmatprep.mubr.bf16.mxu0 %v436
        %1076 = vmatmul.mubr.bf16.gmra.mrb[0].mxu0 %v435
        %v1077 = vpop.f32.mrb[0].mxu0
        %v1078 = vadd.f32 0.0, %v1077
        %v1079 = vpop.f32.mrb[0].mxu0
        %v1080 = vpop.f32.mrb[0].mxu0
        %v1081 = vadd.f32 0.0, %v1080
        %v1082 = vpop.f32.mrb[0].mxu0
        %1083 = vmatprep.mubr.bf16.mxu0 %v444
        %1084 = vmatmul.mubr.bf16.gmra.mrb[0].mxu0 %v443
        %v1085 = vpop.f32.mrb[0].mxu0
        %v1086 = vadd.f32 0.0, %v1085
        %v1087 = vpop.f32.mrb[0].mxu0
        %v1088 = vpop.f32.mrb[0].mxu0
        %v1089 = vadd.f32 0.0, %v1088
        %v1090 = vpop.f32.mrb[0].mxu0
        %1091 = vmatprep.mubr.bf16.mxu0 %v452
        %1092 = vmatmul.mubr.bf16.gmra.mrb[0].mxu0 %v451
        %v1093 = vpop.f32.mrb[0].mxu0
        %v1094 = vadd.f32 0.0, %v1093
        %v1095 = vpop.f32.mrb[0].mxu0
        %v1096 = vpop.f32.mrb[0].mxu0
        %v1097 = vadd.f32 0.0, %v1096
        %v1098 = vpop.f32.mrb[0].mxu0
        %1099 = vmatprep.mubr.bf16.mxu0 %v460
        %1100 = vmatmul.mubr.bf16.gmra.mrb[0].mxu0 %v459
        %v1101 = vpop.f32.mrb[0].mxu0
        %v1102 = vadd.f32 0.0, %v1101
        %v1103 = vpop.f32.mrb[0].mxu0
        %v1104 = vpop.f32.mrb[0].mxu0
        %v1105 = vadd.f32 0.0, %v1104
        %v1106 = vpop.f32.mrb[0].mxu0
        %1107 = vmatprep.mubr.bf16.mxu0 %v468
        %1108 = vmatmul.mubr.bf16.gmra.mrb[0].mxu0 %v467
        %v1109 = vpop.f32.mrb[0].mxu0
        %v1110 = vadd.f32 0.0, %v1109
        %v1111 = vpop.f32.mrb[0].mxu0
        %v1112 = vpop.f32.mrb[0].mxu0
        %v1113 = vadd.f32 0.0, %v1112
        %v1114 = vpop.f32.mrb[0].mxu0
        %1115 = vmatprep.mubr.bf16.mxu0 %v476
        %1116 = vmatmul.mubr.bf16.gmra.mrb[0].mxu0 %v475
        %v1117 = vpop.f32.mrb[0].mxu0
        %v1118 = vadd.f32 0.0, %v1117
        %v1119 = vpop.f32.mrb[0].mxu0
        %v1120 = vpop.f32.mrb[0].mxu0
        %v1121 = vadd.f32 0.0, %v1120
        %v1122 = vpop.f32.mrb[0].mxu0
        %1123 = vmatprep.mubr.bf16.mxu0 %v484
        %1124 = vmatmul.mubr.bf16.gmra.mrb[0].mxu0 %v483
        %v1125 = vpop.f32.mrb[0].mxu0
        %v1126 = vadd.f32 0.0, %v1125
        %v1127 = vpop.f32.mrb[0].mxu0
        %v1128 = vpop.f32.mrb[0].mxu0
        %v1129 = vadd.f32 0.0, %v1128
        %v1130 = vpop.f32.mrb[0].mxu0
        %1131 = vdwg.mxu0
        %1132 = vmatprep.subr.bf16.mxu0 0
        %1133 = vmatpush1.bf16.msra.mxu0 %v891
        %1134 = vmatprep.subr.bf16.mxu0 0
        %1135 = vmatpush1.bf16.msra.mxu0 %v892
        %1136 = vmatprep.subr.bf16.mxu0 0
        %1137 = vmatpush1.bf16.msra.mxu0 %v893
        %1138 = vmatprep.subr.bf16.mxu0 0
        %1139 = vmatpush1.bf16.msra.mxu0 %v894
        %1140 = vmatprep.subr.bf16.mxu0 0
        %1141 = vmatpush1.bf16.msra.mxu0 %v895
        %1142 = vmatprep.subr.bf16.mxu0 0
        %1143 = vmatpush1.bf16.msra.mxu0 %v896
        %1144 = vmatprep.subr.bf16.mxu0 0
        %1145 = vmatpush1.bf16.msra.mxu0 %v897
        %1146 = vmatprep.subr.bf16.mxu0 0
        %1147 = vmatpush1.bf16.msra.mxu0 %v898
        %1148 = vmatprep.subr.bf16.mxu0 0
        %1149 = vmatpush1.bf16.msra.mxu0 %v899
        %1150 = vmatprep.subr.bf16.mxu0 0
        %1151 = vmatpush1.bf16.msra.mxu0 %v900
        %1152 = vmatprep.subr.bf16.mxu0 0
        %1153 = vmatpush1.bf16.msra.mxu0 %v901
        %1154 = vmatprep.subr.bf16.mxu0 0
        %1155 = vmatpush1.bf16.msra.mxu0 %v902
        %1156 = vmatprep.subr.bf16.mxu0 0
        %1157 = vmatpush1.bf16.msra.mxu0 %v903
        %1158 = vmatprep.subr.bf16.mxu0 0
        %1159 = vmatpush1.bf16.msra.mxu0 %v904
        %1160 = vmatprep.subr.bf16.mxu0 0
        %1161 = vmatpush1.bf16.msra.mxu0 %v905
        %1162 = vmatprep.subr.bf16.mxu0 0
        %1163 = vmatpush1.bf16.msra.mxu0 %v906
        %1164 = vmatprep.mubr.bf16.mxu0 %v398
        %1165 = vmatmul.mubr.bf16.gmra.mrb[0].mxu0 %v397
        %v1166 = vpop.f32.mrb[0].mxu0
        %v1167 = vadd.f32 %v1038, %v1166
        %v1168 = vpop.f32.mrb[0].mxu0
        %v1169 = vpop.f32.mrb[0].mxu0
        %v1170 = vadd.f32 %v1041, %v1169
        %v1171 = vpop.f32.mrb[0].mxu0
        %1172 = vmatprep.mubr.bf16.mxu0 %v406
        %1173 = vmatmul.mubr.bf16.gmra.mrb[0].mxu0 %v405
        %v1174 = vpop.f32.mrb[0].mxu0
        %v1175 = vadd.f32 %v1046, %v1174
        %v1176 = vpop.f32.mrb[0].mxu0
        %v1177 = vpop.f32.mrb[0].mxu0
        %v1178 = vadd.f32 %v1049, %v1177
        %v1179 = vpop.f32.mrb[0].mxu0
        %1180 = vmatprep.mubr.bf16.mxu0 %v414
        %1181 = vmatmul.mubr.bf16.gmra.mrb[0].mxu0 %v413
        %v1182 = vpop.f32.mrb[0].mxu0
        %v1183 = vadd.f32 %v1054, %v1182
        %v1184 = vpop.f32.mrb[0].mxu0
        %v1185 = vpop.f32.mrb[0].mxu0
        %v1186 = vadd.f32 %v1057, %v1185
        %v1187 = vpop.f32.mrb[0].mxu0
        %1188 = vmatprep.mubr.bf16.mxu0 %v422
        %1189 = vmatmul.mubr.bf16.gmra.mrb[0].mxu0 %v421
        %v1190 = vpop.f32.mrb[0].mxu0
        %v1191 = vadd.f32 %v1062, %v1190
        %v1192 = vpop.f32.mrb[0].mxu0
        %v1193 = vpop.f32.mrb[0].mxu0
        %v1194 = vadd.f32 %v1065, %v1193
        %v1195 = vpop.f32.mrb[0].mxu0
        %1196 = vmatprep.mubr.bf16.mxu0 %v430
        %1197 = vmatmul.mubr.bf16.gmra.mrb[0].mxu0 %v429
        %v1198 = vpop.f32.mrb[0].mxu0
        %v1199 = vadd.f32 %v1070, %v1198
        %v1200 = vpop.f32.mrb[0].mxu0
        %v1201 = vpop.f32.mrb[0].mxu0
        %v1202 = vadd.f32 %v1073, %v1201
        %v1203 = vpop.f32.mrb[0].mxu0
        %1204 = vmatprep.mubr.bf16.mxu0 %v438
        %1205 = vmatmul.mubr.bf16.gmra.mrb[0].mxu0 %v437
        %v1206 = vpop.f32.mrb[0].mxu0
        %v1207 = vadd.f32 %v1078, %v1206
        %v1208 = vpop.f32.mrb[0].mxu0
        %v1209 = vpop.f32.mrb[0].mxu0
        %v1210 = vadd.f32 %v1081, %v1209
        %v1211 = vpop.f32.mrb[0].mxu0
        %1212 = vmatprep.mubr.bf16.mxu0 %v446
        %1213 = vmatmul.mubr.bf16.gmra.mrb[0].mxu0 %v445
        %v1214 = vpop.f32.mrb[0].mxu0
        %v1215 = vadd.f32 %v1086, %v1214
        %v1216 = vpop.f32.mrb[0].mxu0
        %v1217 = vpop.f32.mrb[0].mxu0
        %v1218 = vadd.f32 %v1089, %v1217
        %v1219 = vpop.f32.mrb[0].mxu0
        %1220 = vmatprep.mubr.bf16.mxu0 %v454
        %1221 = vmatmul.mubr.bf16.gmra.mrb[0].mxu0 %v453
        %v1222 = vpop.f32.mrb[0].mxu0
        %v1223 = vadd.f32 %v1094, %v1222
        %v1224 = vpop.f32.mrb[0].mxu0
        %v1225 = vpop.f32.mrb[0].mxu0
        %v1226 = vadd.f32 %v1097, %v1225
        %v1227 = vpop.f32.mrb[0].mxu0
        %1228 = vmatprep.mubr.bf16.mxu0 %v462
        %1229 = vmatmul.mubr.bf16.gmra.mrb[0].mxu0 %v461
        %v1230 = vpop.f32.mrb[0].mxu0
        %v1231 = vadd.f32 %v1102, %v1230
        %v1232 = vpop.f32.mrb[0].mxu0
        %v1233 = vpop.f32.mrb[0].mxu0
        %v1234 = vadd.f32 %v1105, %v1233
        %v1235 = vpop.f32.mrb[0].mxu0
        %1236 = vmatprep.mubr.bf16.mxu0 %v470
        %1237 = vmatmul.mubr.bf16.gmra.mrb[0].mxu0 %v469
        %v1238 = vpop.f32.mrb[0].mxu0
        %v1239 = vadd.f32 %v1110, %v1238
        %v1240 = vpop.f32.mrb[0].mxu0
        %v1241 = vpop.f32.mrb[0].mxu0
        %v1242 = vadd.f32 %v1113, %v1241
        %v1243 = vpop.f32.mrb[0].mxu0
        %1244 = vmatprep.mubr.bf16.mxu0 %v478
        %1245 = vmatmul.mubr.bf16.gmra.mrb[0].mxu0 %v477
        %v1246 = vpop.f32.mrb[0].mxu0
        %v1247 = vadd.f32 %v1118, %v1246
        %v1248 = vpop.f32.mrb[0].mxu0
        %v1249 = vpop.f32.mrb[0].mxu0
        %v1250 = vadd.f32 %v1121, %v1249
        %v1251 = vpop.f32.mrb[0].mxu0
        %1252 = vmatprep.mubr.bf16.mxu0 %v486
        %1253 = vmatmul.mubr.bf16.gmra.mrb[0].mxu0 %v485
        %v1254 = vpop.f32.mrb[0].mxu0
        %v1255 = vadd.f32 %v1126, %v1254
        %v1256 = vpop.f32.mrb[0].mxu0
        %v1257 = vpop.f32.mrb[0].mxu0
        %v1258 = vadd.f32 %v1129, %v1257
        %v1259 = vpop.f32.mrb[0].mxu0
        %1260 = vdwg.mxu0
        %1261 = vmatprep.subr.bf16.mxu0 0
        %1262 = vmatpush1.bf16.msra.mxu0 %v907
        %1263 = vmatprep.subr.bf16.mxu0 0
        %1264 = vmatpush1.bf16.msra.mxu0 %v908
        %1265 = vmatprep.subr.bf16.mxu0 0
        %1266 = vmatpush1.bf16.msra.mxu0 %v909
        %1267 = vmatprep.subr.bf16.mxu0 0
        %1268 = vmatpush1.bf16.msra.mxu0 %v910
        %1269 = vmatprep.subr.bf16.mxu0 0
        %1270 = vmatpush1.bf16.msra.mxu0 %v911
        %1271 = vmatprep.subr.bf16.mxu0 0
        %1272 = vmatpush1.bf16.msra.mxu0 %v912
        %1273 = vmatprep.subr.bf16.mxu0 0
        %1274 = vmatpush1.bf16.msra.mxu0 %v913
        %1275 = vmatprep.subr.bf16.mxu0 0
        %1276 = vmatpush1.bf16.msra.mxu0 %v914
        %1277 = vmatprep.subr.bf16.mxu0 0
        %1278 = vmatpush1.bf16.msra.mxu0 %v915
        %1279 = vmatprep.subr.bf16.mxu0 0
        %1280 = vmatpush1.bf16.msra.mxu0 %v916
        %1281 = vmatprep.subr.bf16.mxu0 0
        %1282 = vmatpush1.bf16.msra.mxu0 %v917
        %1283 = vmatprep.subr.bf16.mxu0 0
        %1284 = vmatpush1.bf16.msra.mxu0 %v918
        %1285 = vmatprep.subr.bf16.mxu0 0
        %1286 = vmatpush1.bf16.msra.mxu0 %v919
        %1287 = vmatprep.subr.bf16.mxu0 0
        %1288 = vmatpush1.bf16.msra.mxu0 %v920
        %1289 = vmatprep.subr.bf16.mxu0 0
        %1290 = vmatpush1.bf16.msra.mxu0 %v921
        %1291 = vmatprep.subr.bf16.mxu0 0
        %1292 = vmatpush1.bf16.msra.mxu0 %v922
        %1293 = vmatprep.mubr.bf16.mxu0 %v400
        %1294 = vmatmul.mubr.bf16.gmra.mrb[0].mxu0 %v399
        %v1295 = vpop.f32.mrb[0].mxu0
        %v1296 = vadd.f32 %v1167, %v1295
        %v1297 = vpop.f32.mrb[0].mxu0
        %v1298 = vpop.f32.mrb[0].mxu0
        %v1299 = vadd.f32 %v1170, %v1298
        %v1300 = vpop.f32.mrb[0].mxu0
        %1301 = vmatprep.mubr.bf16.mxu0 %v408
        %1302 = vmatmul.mubr.bf16.gmra.mrb[0].mxu0 %v407
        %v1303 = vpop.f32.mrb[0].mxu0
        %v1304 = vadd.f32 %v1175, %v1303
        %v1305 = vpop.f32.mrb[0].mxu0
        %v1306 = vpop.f32.mrb[0].mxu0
        %v1307 = vadd.f32 %v1178, %v1306
        %v1308 = vpop.f32.mrb[0].mxu0
        %1309 = vmatprep.mubr.bf16.mxu0 %v416
        %1310 = vmatmul.mubr.bf16.gmra.mrb[0].mxu0 %v415
        %v1311 = vpop.f32.mrb[0].mxu0
        %v1312 = vadd.f32 %v1183, %v1311
        %v1313 = vpop.f32.mrb[0].mxu0
        %v1314 = vpop.f32.mrb[0].mxu0
        %v1315 = vadd.f32 %v1186, %v1314
        %v1316 = vpop.f32.mrb[0].mxu0
        %1317 = vmatprep.mubr.bf16.mxu0 %v424
        %1318 = vmatmul.mubr.bf16.gmra.mrb[0].mxu0 %v423
        %v1319 = vpop.f32.mrb[0].mxu0
        %v1320 = vadd.f32 %v1191, %v1319
        %v1321 = vpop.f32.mrb[0].mxu0
        %v1322 = vpop.f32.mrb[0].mxu0
        %v1323 = vadd.f32 %v1194, %v1322
        %v1324 = vpop.f32.mrb[0].mxu0
        %1325 = vmatprep.mubr.bf16.mxu0 %v432
        %1326 = vmatmul.mubr.bf16.gmra.mrb[0].mxu0 %v431
        %v1327 = vpop.f32.mrb[0].mxu0
        %v1328 = vadd.f32 %v1199, %v1327
        %v1329 = vpop.f32.mrb[0].mxu0
        %v1330 = vpop.f32.mrb[0].mxu0
        %v1331 = vadd.f32 %v1202, %v1330
        %v1332 = vpop.f32.mrb[0].mxu0
        %1333 = vmatprep.mubr.bf16.mxu0 %v440
        %1334 = vmatmul.mubr.bf16.gmra.mrb[0].mxu0 %v439
        %v1335 = vpop.f32.mrb[0].mxu0
        %v1336 = vadd.f32 %v1207, %v1335
        %v1337 = vpop.f32.mrb[0].mxu0
        %v1338 = vpop.f32.mrb[0].mxu0
        %v1339 = vadd.f32 %v1210, %v1338
        %v1340 = vpop.f32.mrb[0].mxu0
        %1341 = vmatprep.mubr.bf16.mxu0 %v448
        %1342 = vmatmul.mubr.bf16.gmra.mrb[0].mxu0 %v447
        %v1343 = vpop.f32.mrb[0].mxu0
        %v1344 = vadd.f32 %v1215, %v1343
        %v1345 = vpop.f32.mrb[0].mxu0
        %v1346 = vpop.f32.mrb[0].mxu0
        %v1347 = vadd.f32 %v1218, %v1346
        %v1348 = vpop.f32.mrb[0].mxu0
        %1349 = vmatprep.mubr.bf16.mxu0 %v456
        %1350 = vmatmul.mubr.bf16.gmra.mrb[0].mxu0 %v455
        %v1351 = vpop.f32.mrb[0].mxu0
        %v1352 = vadd.f32 %v1223, %v1351
        %v1353 = vpop.f32.mrb[0].mxu0
        %v1354 = vpop.f32.mrb[0].mxu0
        %v1355 = vadd.f32 %v1226, %v1354
        %v1356 = vpop.f32.mrb[0].mxu0
        %1357 = vmatprep.mubr.bf16.mxu0 %v464
        %1358 = vmatmul.mubr.bf16.gmra.mrb[0].mxu0 %v463
        %v1359 = vpop.f32.mrb[0].mxu0
        %v1360 = vadd.f32 %v1231, %v1359
        %v1361 = vpop.f32.mrb[0].mxu0
        %v1362 = vpop.f32.mrb[0].mxu0
        %v1363 = vadd.f32 %v1234, %v1362
        %v1364 = vpop.f32.mrb[0].mxu0
        %1365 = vmatprep.mubr.bf16.mxu0 %v472
        %1366 = vmatmul.mubr.bf16.gmra.mrb[0].mxu0 %v471
        %v1367 = vpop.f32.mrb[0].mxu0
        %v1368 = vadd.f32 %v1239, %v1367
        %v1369 = vpop.f32.mrb[0].mxu0
        %v1370 = vpop.f32.mrb[0].mxu0
        %v1371 = vadd.f32 %v1242, %v1370
        %v1372 = vpop.f32.mrb[0].mxu0
        %1373 = vmatprep.mubr.bf16.mxu0 %v480
        %1374 = vmatmul.mubr.bf16.gmra.mrb[0].mxu0 %v479
        %v1375 = vpop.f32.mrb[0].mxu0
        %v1376 = vadd.f32 %v1247, %v1375
        %v1377 = vpop.f32.mrb[0].mxu0
        %v1378 = vpop.f32.mrb[0].mxu0
        %v1379 = vadd.f32 %v1250, %v1378
        %v1380 = vpop.f32.mrb[0].mxu0
        %1381 = vmatprep.mubr.bf16.mxu0 %v488
        %1382 = vmatmul.mubr.bf16.gmra.mrb[0].mxu0 %v487
        %v1383 = vpop.f32.mrb[0].mxu0
        %v1384 = vadd.f32 %v1255, %v1383
        %v1385 = vpop.f32.mrb[0].mxu0
        %v1386 = vpop.f32.mrb[0].mxu0
        %v1387 = vadd.f32 %v1258, %v1386
        %v1388 = vpop.f32.mrb[0].mxu0
        %1389 = vdwg.mxu0
        %1390 = vmatprep.subr.bf16.mxu0 0
        %1391 = vmatpush1.bf16.msra.mxu0 %v923
        %1392 = vmatprep.subr.bf16.mxu0 0
        %1393 = vmatpush1.bf16.msra.mxu0 %v924
        %1394 = vmatprep.subr.bf16.mxu0 0
        %1395 = vmatpush1.bf16.msra.mxu0 %v925
        %1396 = vmatprep.subr.bf16.mxu0 0
        %1397 = vmatpush1.bf16.msra.mxu0 %v926
        %1398 = vmatprep.subr.bf16.mxu0 0
        %1399 = vmatpush1.bf16.msra.mxu0 %v927
        %1400 = vmatprep.subr.bf16.mxu0 0
        %1401 = vmatpush1.bf16.msra.mxu0 %v928
        %1402 = vmatprep.subr.bf16.mxu0 0
        %1403 = vmatpush1.bf16.msra.mxu0 %v929
        %1404 = vmatprep.subr.bf16.mxu0 0
        %1405 = vmatpush1.bf16.msra.mxu0 %v930
        %1406 = vmatprep.subr.bf16.mxu0 0
        %1407 = vmatpush1.bf16.msra.mxu0 %v931
        %1408 = vmatprep.subr.bf16.mxu0 0
        %1409 = vmatpush1.bf16.msra.mxu0 %v932
        %1410 = vmatprep.subr.bf16.mxu0 0
        %1411 = vmatpush1.bf16.msra.mxu0 %v933
        %1412 = vmatprep.subr.bf16.mxu0 0
        %1413 = vmatpush1.bf16.msra.mxu0 %v934
        %1414 = vmatprep.subr.bf16.mxu0 0
        %1415 = vmatpush1.bf16.msra.mxu0 %v935
        %1416 = vmatprep.subr.bf16.mxu0 0
        %1417 = vmatpush1.bf16.msra.mxu0 %v936
        %1418 = vmatprep.subr.bf16.mxu0 0
        %1419 = vmatpush1.bf16.msra.mxu0 %v937
        %1420 = vmatprep.subr.bf16.mxu0 0
        %1421 = vmatpush1.bf16.msra.mxu0 %v938
        %1422 = vmatprep.mubr.bf16.mxu0 %v402
        %1423 = vmatmul.mubr.bf16.gmra.mrb[0].mxu0 %v401
        %v1424 = vpop.f32.mrb[0].mxu0
        %v1425 = vadd.f32 %v1296, %v1424
        %v1426 = vpop.f32.mrb[0].mxu0
        %v1427 = vpop.f32.mrb[0].mxu0
        %v1428 = vadd.f32 %v1299, %v1427
        %v1429 = vpop.f32.mrb[0].mxu0
        %1430 = vmatprep.mubr.bf16.mxu0 %v410
        %1431 = vmatmul.mubr.bf16.gmra.mrb[0].mxu0 %v409
        %v1432 = vpop.f32.mrb[0].mxu0
        %v1433 = vadd.f32 %v1304, %v1432
        %v1434 = vpop.f32.mrb[0].mxu0
        %v1435 = vpop.f32.mrb[0].mxu0
        %v1436 = vadd.f32 %v1307, %v1435
        %v1437 = vpop.f32.mrb[0].mxu0
        %1438 = vmatprep.mubr.bf16.mxu0 %v418
        %1439 = vmatmul.mubr.bf16.gmra.mrb[0].mxu0 %v417
        %v1440 = vpop.f32.mrb[0].mxu0
        %v1441 = vadd.f32 %v1312, %v1440
        %v1442 = vpop.f32.mrb[0].mxu0
        %v1443 = vpop.f32.mrb[0].mxu0
        %v1444 = vadd.f32 %v1315, %v1443
        %v1445 = vpop.f32.mrb[0].mxu0
        %1446 = vmatprep.mubr.bf16.mxu0 %v426
        %1447 = vmatmul.mubr.bf16.gmra.mrb[0].mxu0 %v425
        %v1448 = vpop.f32.mrb[0].mxu0
        %v1449 = vadd.f32 %v1320, %v1448
        %v1450 = vpop.f32.mrb[0].mxu0
        %v1451 = vpop.f32.mrb[0].mxu0
        %v1452 = vadd.f32 %v1323, %v1451
        %v1453 = vpop.f32.mrb[0].mxu0
        %1454 = vmatprep.mubr.bf16.mxu0 %v434
        %1455 = vmatmul.mubr.bf16.gmra.mrb[0].mxu0 %v433
        %v1456 = vpop.f32.mrb[0].mxu0
        %v1457 = vadd.f32 %v1328, %v1456
        %v1458 = vpop.f32.mrb[0].mxu0
        %v1459 = vpop.f32.mrb[0].mxu0
        %v1460 = vadd.f32 %v1331, %v1459
        %v1461 = vpop.f32.mrb[0].mxu0
        %1462 = vmatprep.mubr.bf16.mxu0 %v442
        %1463 = vmatmul.mubr.bf16.gmra.mrb[0].mxu0 %v441
        %v1464 = vpop.f32.mrb[0].mxu0
        %v1465 = vadd.f32 %v1336, %v1464
        %v1466 = vpop.f32.mrb[0].mxu0
        %v1467 = vpop.f32.mrb[0].mxu0
        %v1468 = vadd.f32 %v1339, %v1467
        %v1469 = vpop.f32.mrb[0].mxu0
        %1470 = vmatprep.mubr.bf16.mxu0 %v450
        %1471 = vmatmul.mubr.bf16.gmra.mrb[0].mxu0 %v449
        %v1472 = vpop.f32.mrb[0].mxu0
        %v1473 = vadd.f32 %v1344, %v1472
        %v1474 = vpop.f32.mrb[0].mxu0
        %v1475 = vpop.f32.mrb[0].mxu0
        %v1476 = vadd.f32 %v1347, %v1475
        %v1477 = vpop.f32.mrb[0].mxu0
        %1478 = vmatprep.mubr.bf16.mxu0 %v458
        %1479 = vmatmul.mubr.bf16.gmra.mrb[0].mxu0 %v457
        %v1480 = vpop.f32.mrb[0].mxu0
        %v1481 = vadd.f32 %v1352, %v1480
        %v1482 = vpop.f32.mrb[0].mxu0
        %v1483 = vpop.f32.mrb[0].mxu0
        %v1484 = vadd.f32 %v1355, %v1483
        %v1485 = vpop.f32.mrb[0].mxu0
        %1486 = vmatprep.mubr.bf16.mxu0 %v466
        %1487 = vmatmul.mubr.bf16.gmra.mrb[0].mxu0 %v465
        %v1488 = vpop.f32.mrb[0].mxu0
        %v1489 = vadd.f32 %v1360, %v1488
        %v1490 = vpop.f32.mrb[0].mxu0
        %v1491 = vpop.f32.mrb[0].mxu0
        %v1492 = vadd.f32 %v1363, %v1491
        %v1493 = vpop.f32.mrb[0].mxu0
        %1494 = vmatprep.mubr.bf16.mxu0 %v474
        %1495 = vmatmul.mubr.bf16.gmra.mrb[0].mxu0 %v473
        %v1496 = vpop.f32.mrb[0].mxu0
        %v1497 = vadd.f32 %v1368, %v1496
        %v1498 = vpop.f32.mrb[0].mxu0
        %v1499 = vpop.f32.mrb[0].mxu0
        %v1500 = vadd.f32 %v1371, %v1499
        %v1501 = vpop.f32.mrb[0].mxu0
        %1502 = vmatprep.mubr.bf16.mxu0 %v482
        %1503 = vmatmul.mubr.bf16.gmra.mrb[0].mxu0 %v481
        %v1504 = vpop.f32.mrb[0].mxu0
        %v1505 = vadd.f32 %v1376, %v1504
        %v1506 = vpop.f32.mrb[0].mxu0
        %v1507 = vpop.f32.mrb[0].mxu0
        %v1508 = vadd.f32 %v1379, %v1507
        %v1509 = vpop.f32.mrb[0].mxu0
        %1510 = vmatprep.mubr.bf16.mxu0 %v490
        %1511 = vmatmul.mubr.bf16.gmra.mrb[0].mxu0 %v489
        %v1512 = vpop.f32.mrb[0].mxu0
        %v1513 = vadd.f32 %v1384, %v1512
        %v1514 = vpop.f32.mrb[0].mxu0
        %v1515 = vpop.f32.mrb[0].mxu0
        %v1516 = vadd.f32 %v1387, %v1515
        %v1517 = vpop.f32.mrb[0].mxu0
        %1518 = vdwg.mxu0
        %v1519 = vld [vmem:[%s0] sm:$0xff]
        %v1520 = vld [vmem:[%s0 + $0x8] sm:$0xff]
        %v1521 = vld [vmem:[%s0 + $0x10] sm:$0xff]
        %v1522 = vld [vmem:[%s0 + $0x18] sm:$0xff]
        %v1523 = vld [vmem:[%s0 + $0x20] sm:$0xff]
        %v1524 = vld [vmem:[%s0 + $0x28] sm:$0xff]
        %v1525 = vpack.c.bf16 %v1428, %v1425
        %v1526 = vpack.c.bf16 %v1436, %v1433
        %v1527 = vpack.c.bf16 %v1444, %v1441
        %v1528 = vpack.c.bf16 %v1452, %v1449
        %v1529 = vpack.c.bf16 %v1460, %v1457
        %v1530 = vpack.c.bf16 %v1468, %v1465
        %v1531 = vpack.c.bf16 %v1476, %v1473
        %v1532 = vpack.c.bf16 %v1484, %v1481
        %v1533 = vpack.c.bf16 %v1492, %v1489
        %v1534 = vpack.c.bf16 %v1500, %v1497
        %v1535 = vpack.c.bf16 %v1508, %v1505
        %v1536 = vpack.c.bf16 %v1516, %v1513
        %v1543 = vunpack.c.l.b16 %v1519
        %v1544 = vunpack.c.h.b16 %v1519
        %v1545 = vunpack.c.l.b16 %v1520
        %v1546 = vunpack.c.h.b16 %v1520
        %v1547 = vunpack.c.l.b16 %v1521
        %v1548 = vunpack.c.h.b16 %v1521
        %v1549 = vunpack.c.l.b16 %v1522
        %v1550 = vunpack.c.h.b16 %v1522
        %v1551 = vunpack.c.l.b16 %v1523
        %v1552 = vunpack.c.h.b16 %v1523
        %v1553 = vunpack.c.l.b16 %v1524
        %v1554 = vunpack.c.h.b16 %v1524
        %v1555 = vpack.c.b16 %v1545, %v1543
        %v1556 = vpack.c.b16 %v1546, %v1544
        %v1557 = vpack.c.b16 %v1549, %v1547
        %v1558 = vpack.c.b16 %v1550, %v1548
        %v1559 = vpack.c.b16 %v1553, %v1551
        %v1560 = vpack.c.b16 %v1554, %v1552
        %vm1564 = vcmask 523264
        %v1566 = vsel %vm1564, %v1556, 0
        %v1569 = vsel %vm1564, %v1558, 0
        %v1572 = vsel %vm1564, %v1560, 0
        %1574 = vmatprep.subr.bf16.mxu0 0
        %1575 = vmatpush1.bf16.msra.mxu0 %v1525
        %1576 = vmatprep.subr.bf16.mxu0 0
        %1577 = vmatpush1.bf16.msra.mxu0 %v1526
        %1578 = vmatprep.subr.bf16.mxu0 0
        %1579 = vmatpush1.bf16.msra.mxu0 %v1527
        %1580 = vmatprep.subr.bf16.mxu0 0
        %1581 = vmatpush1.bf16.msra.mxu0 %v1528
        %1582 = vmatprep.subr.bf16.mxu0 0
        %1583 = vmatpush1.bf16.msra.mxu0 %v1529
        %1584 = vmatprep.subr.bf16.mxu0 0
        %1585 = vmatpush1.bf16.msra.mxu0 %v1530
        %1586 = vmatprep.subr.bf16.mxu0 0
        %1587 = vmatpush1.bf16.msra.mxu0 %v1531
        %1588 = vmatprep.subr.bf16.mxu0 0
        %1589 = vmatpush1.bf16.msra.mxu0 %v1532
        %1590 = vmatprep.subr.bf16.mxu0 0
        %1591 = vmatpush1.bf16.msra.mxu0 %v1533
        %1592 = vmatprep.subr.bf16.mxu0 0
        %1593 = vmatpush1.bf16.msra.mxu0 %v1534
        %1594 = vmatprep.subr.bf16.mxu0 0
        %1595 = vmatpush1.bf16.msra.mxu0 %v1535
        %1596 = vmatprep.subr.bf16.mxu0 0
        %1597 = vmatpush1.bf16.msra.mxu0 %v1536
        %1598 = vmatprep.subr.bf16.mxu0 0
        %1599 = vmatpush1.bf16.msra.mxu0 0
        %1600 = vmatprep.subr.bf16.mxu0 0
        %1601 = vmatpush1.bf16.msra.mxu0 0
        %1602 = vmatprep.subr.bf16.mxu0 0
        %1603 = vmatpush1.bf16.msra.mxu0 0
        %1604 = vmatprep.subr.bf16.mxu0 0
        %1605 = vmatpush1.bf16.msra.mxu0 0
        %1606 = vmatprep.mubr.bf16.mxu0 %v1566
        %1607 = vmatmul.mubr.bf16.gmra.mrb[0].mxu0 %v1555
        %v1608 = vpop.f32.mrb[0].mxu0
        %v1609 = vadd.f32 0.0, %v1608
        %v1610 = vpop.f32.mrb[0].mxu0
        %v1611 = vpop.f32.mrb[0].mxu0
        %v1612 = vadd.f32 0.0, %v1611
        %v1613 = vpop.f32.mrb[0].mxu0
        %1614 = vmatprep.mubr.bf16.mxu0 %v1569
        %1615 = vmatmul.mubr.bf16.gmra.mrb[0].mxu0 %v1557
        %v1616 = vpop.f32.mrb[0].mxu0
        %v1617 = vadd.f32 0.0, %v1616
        %v1618 = vpop.f32.mrb[0].mxu0
        %v1619 = vpop.f32.mrb[0].mxu0
        %v1620 = vadd.f32 0.0, %v1619
        %v1621 = vpop.f32.mrb[0].mxu0
        %1622 = vmatprep.mubr.bf16.mxu0 %v1572
        %1623 = vmatmul.mubr.bf16.gmra.mrb[0].mxu0 %v1559
        %v1624 = vpop.f32.mrb[0].mxu0
        %v1625 = vadd.f32 0.0, %v1624
        %v1626 = vpop.f32.mrb[0].mxu0
        %v1627 = vpop.f32.mrb[0].mxu0
        %v1628 = vadd.f32 0.0, %v1627
        %v1629 = vpop.f32.mrb[0].mxu0
        %1630 = vdwg.mxu0
        %v1631 = vmul.f32 %v1609, 0.25
        %v1632 = vmul.f32 %v1612, 0.25
        %v1633 = vmul.f32 %v1617, 0.25
        %v1634 = vmul.f32 %v1620, 0.25
        %v1635 = vmul.f32 %v1625, 0.25
        %v1636 = vmul.f32 %v1628, 0.25
        %v1637 = vld [vmem:[%s3] sm:$0x1]
        %v1639 = vlaneseq
        %v1640 = vshrl.u32 %v1639, 7
        %v1641 = vsub.s32 0, %v1640
        %v1642 = vrot.slane %v1637, %v1641
        %v1644 = vadd.f32 %v1631, %v1642
        %v1645 = vadd.f32 %v1632, %v1642
        %v1646 = vadd.f32 %v1633, %v1642
        %v1647 = vadd.f32 %v1634, %v1642
        %v1648 = vadd.f32 %v1635, %v1642
        %v1649 = vadd.f32 %v1636, %v1642
        %1650 = vst [vmem:[%s193] sm:$0xff] %v1644
        %1651 = vst [vmem:[%s193 + $0x8] sm:$0xff] %v1645
        %1652 = vst [vmem:[%s193 + $0x10] sm:$0xff] %v1646
        %1653 = vst [vmem:[%s193 + $0x18] sm:$0xff] %v1647
        %1654 = vst [vmem:[%s193 + $0x20] sm:$0xff] %v1648
        %1655 = vst [vmem:[%s193 + $0x28] sm:$0xff] %v1649
        %s1656 = sand.u32 %s115, 1
        %s1657 = scalar_lea.sflag [#allocation3], %s1656
        %s1658 = sand.u32 %s115, 1
        %s1659 = smul.addr %s1658, 48
        %s1660 = scalar_lea.vmem [#allocation2], %s1659
        // Predicated region
        $region37: #{multicrop_forward.1} parent=35 // pred_check
          %p1661 = pneg %p125
        $region38: #{multicrop_forward.1} parent=35 // pred_check_branch
          %1663 = sbr.rel (%p1661) target = $region40
        $region39: #{multicrop_forward.1} parent=35 // pred_region
          %s1664 = smul.u32 6, %s18
          %s1666 = ssub.s32 768, 768
          %1667 = vsyncadd %s1657, %s1666
          %s1668 = smul.addr %s1664, 128
          %s1669 = scalar_lea.hbm %s4, %s1668
          %s1670 = sshll.u32 %s1660, 4
          %s1671 = int_to_ptr.vmem [resolvable:$true] %s1670
          %1676 = dma.vmem_to_hbm [thread:$0]  %s1671, 768, %s1669, %s1657, 128, 128, 8
        $region40: #{multicrop_forward.1} parent=35 // pred_fallthru
          _
      $region36: #{multicrop_forward.1} parent=5 // pred_fallthru
        _
      %p1677 = scmp.le.s32.totalorder 2, %s13
      // Predicated region
      $region41: #{multicrop_forward.1} parent=5 // pred_check
        %p1678 = pneg %p1677
      $region42: #{multicrop_forward.1} parent=5 // pred_check_branch
        %1680 = sbr.rel (%p1678) target = $region44
      $region43: #{multicrop_forward.1} parent=5 // pred_region
        %s1681 = ssub.s32 %s13, 2
        // Predicated region
        $region45: #{multicrop_forward.1} parent=43 // pred_check
          %p1682 = pneg %p131
        $region46: #{multicrop_forward.1} parent=43 // pred_check_branch
          %1684 = sbr.rel (%p1682) target = $region48
        $region47: #{multicrop_forward.1} parent=43 // pred_region
          %s1685 = sand.u32 %s116, 1
          %s1686 = scalar_lea.sflag [#allocation3], %s1685
          %s1687 = sand.u32 %s116, 1
          %s1688 = smul.addr %s1687, 48
          %s1689 = scalar_lea.vmem [#allocation2], %s1688
          %1690 = dma.done %s1686, 768
        $region48: #{multicrop_forward.1} parent=43 // pred_fallthru
          _
      $region44: #{multicrop_forward.1} parent=5 // pred_fallthru
        _
    $region6: #{multicrop_forward.1} parent=1 // loop_footer
      %s17 = sadd.s32 1, %s13
    $region7: #{multicrop_forward.1} parent=1 // loop_footer_branch
      %12 = sbr.rel target = $region3
    $region8: #{multicrop_forward.1} parent=1 // loop_exit
      _
    %1691 = vsyncpa [#allocation3], 1
    %s1692 = scalar_lea.sflag [#allocation3], 1
    %1693 = vsyncpa %s1692, 1

</llo_original>
